<compile_context>
chip_gen: v7x
topology: tpu7x:2x2x1
jax: 0.10.0
libtpu: 0.0.40
codegen_flags: <defaults>
</compile_context>

<pallas_src>
import jax
import jax.numpy as jnp
import numpy as np
from jax.experimental import pallas as pl
from jax.experimental.pallas import tpu as pltpu


# ----------------------------------------------------------------------------
# Fused kernel: row gather -> linear "model" -> cosine similarity -> masked SSE.
# One grid step handles one block of pairs; partial SSE goes to a lane-dense
# (8, 128) tile (value at [0, 0], zeros elsewhere).
# ----------------------------------------------------------------------------
def _fused_cosine_mse_kernel(meta_ref, lefts_ref, rights_ref,     # SMEM (prefetch)
                             data_ref, w1_ref, w2_ref,            # VMEM inputs
                             out_ref,                             # VMEM output
                             lbuf, rbuf):                         # VMEM scratch
    num_aligned = meta_ref[0]          # int32 scalar (SMEM)
    num_pairs = meta_ref[1]            # int32 scalar (SMEM)

    tp = lbuf.shape[0]                 # pairs per block (multiple of 8)
    base = pl.program_id(0) * tp       # first global pair id of this block

    # index_select(dim=0) as a scalar gather loop: SMEM index -> dynamic
    # sublane slice of the VMEM-resident `data`. O(tp * D_IN); no one-hot.
    def gather_body(i, carry):
        li = lefts_ref[base + i]
        ri = rights_ref[base + i]
        lbuf[pl.ds(i, 1), :] = data_ref[pl.ds(li, 1), :]
        rbuf[pl.ds(i, 1), :] = data_ref[pl.ds(ri, 1), :]
        return carry

    jax.lax.fori_loop(0, tp, gather_body, 0, unroll=8)

    # Synthetic "model": two linear projections applied to the gathered rows.
    # HIGHEST precision -> no bf16 rounding on the MXU (matches f32 reference).
    # TODO(synk): the torch module wraps an arbitrary `model`; two linear
    # projections stand in for it here.
    hi = jax.lax.Precision.HIGHEST
    left = jnp.dot(lbuf[...], w1_ref[...], precision=hi,
                   preferred_element_type=jnp.float32)             # (tp, D)
    right = jnp.dot(rbuf[...], w2_ref[...], precision=hi,
                    preferred_element_type=jnp.float32)            # (tp, D)

    # Cosine similarity with torch's eps semantics: clamp the PRODUCT of the
    # squared norms; 1/sqrt on the EUP via rsqrt.
    eps = jnp.float32(1e-8)
    dots = jnp.sum(left * right, axis=-1, keepdims=True)           # (tp, 1)
    nl2 = jnp.sum(left * left, axis=-1, keepdims=True)             # (tp, 1)
    nr2 = jnp.sum(right * right, axis=-1, keepdims=True)           # (tp, 1)
    cos = dots * jax.lax.rsqrt(jnp.maximum(nl2 * nr2, eps * eps))  # (tp, 1)

    # Masked squared error vs target = [1]*num_aligned ++ [0]*rest; padded
    # rows (global id >= num_pairs) contribute zero.
    row = jax.lax.broadcasted_iota(jnp.int32, (tp, 1), 0) + base
    target = jnp.where(row < num_aligned, jnp.float32(1.0), jnp.float32(0.0))
    valid = (row < num_pairs).astype(jnp.float32)
    diff = (cos - target) * valid
    sse = jnp.sum(diff * diff, keepdims=True)                      # (1, 1)

    # Lane-dense (8, 128) partial tile: SSE at [0, 0], zeros elsewhere, so the
    # wrapper can jnp.sum the whole output; avoids a (1,1) masked vst block.
    r8 = jax.lax.broadcasted_iota(jnp.int32, (8, 128), 0)
    c128 = jax.lax.broadcasted_iota(jnp.int32, (8, 128), 1)
    out_ref[...] = jnp.where((r8 == 0) & (c128 == 0), sse, jnp.float32(0.0))


# ----------------------------------------------------------------------------
# Wrapper (mirrors CosineSimilarityLoss3.forward; `matches` is unused in torch).
# ----------------------------------------------------------------------------
def cosine_similarity_loss3(data, w1, w2, double_left_tensor, double_right_tensor,
                            matches=None, block_pairs=128):
    del matches  # unused by the torch module's forward as well
    num_pairs = int(double_left_tensor.shape[0])
    if num_pairs == 0:
        return jnp.float32(0.0)
    assert num_pairs % 2 == 0, "torch target has length 2*(P//2); P must be even"
    num_aligned = num_pairs // 2

    n, d_in = data.shape
    d_out = w1.shape[1]

    # Pairs per grid block (sublane multiple); grid axis is "parallel" so v7x
    # shards blocks across its two TensorCores.
    tp = min(block_pairs, ((num_pairs + 7) // 8) * 8)
    p_pad = ((num_pairs + tp - 1) // tp) * tp
    grid = (p_pad // tp,)

    # Index padding is O(P) int32 (negligible); padded rows are masked in-kernel.
    lefts_p = jnp.pad(double_left_tensor.astype(jnp.int32), (0, p_pad - num_pairs))
    rights_p = jnp.pad(double_right_tensor.astype(jnp.int32), (0, p_pad - num_pairs))
    meta = jnp.array([num_aligned, num_pairs], dtype=jnp.int32)

    partial = pl.pallas_call(
        _fused_cosine_mse_kernel,
        out_shape=jax.ShapeDtypeStruct((8 * grid[0], 128), jnp.float32),
        grid_spec=pltpu.PrefetchScalarGridSpec(
            num_scalar_prefetch=3,          # meta, lefts, rights -> SMEM
            grid=grid,
            in_specs=[
                # data stays VMEM-resident (random-access gather needs it).
                # TODO(synk): for N*D_IN too large for VMEM, stream data over
                # an inner N-tiled pipeline (pltpu.emit_pipeline) instead.
                pl.BlockSpec((n, d_in), lambda b, m, l, r: (0, 0)),
                pl.BlockSpec((d_in, d_out), lambda b, m, l, r: (0, 0)),   # w1
                pl.BlockSpec((d_in, d_out), lambda b, m, l, r: (0, 0)),   # w2
            ],
            out_specs=pl.BlockSpec((8, 128), lambda b, m, l, r: (b, 0)),
            scratch_shapes=[pltpu.VMEM((tp, d_in), data.dtype),   # gathered left rows
                            pltpu.VMEM((tp, d_in), data.dtype)],  # gathered right rows
        ),
        compiler_params=pltpu.CompilerParams(
            dimension_semantics=("parallel",),
            vmem_limit_bytes=32 * 1024 * 1024),
    )(meta, lefts_p, rights_p, data, w1, w2)

    # Partial SSE tiles are zero except [0, 0] of each block; sum + divide.
    return jnp.sum(partial) / jnp.float32(num_pairs)


# ----------------------------------------------------------------------------
# Pure-JAX reference (torch semantics, incl. product-clamped eps) for checks.
# ----------------------------------------------------------------------------
def _reference_loss(data, w1, w2, lefts, rights):
    hi = jax.lax.Precision.HIGHEST
    x_one = jnp.dot(data, w1, precision=hi)
    x_two = jnp.dot(data, w2, precision=hi)
    l = x_one[lefts]
    r = x_two[rights]
    eps = jnp.float32(1e-8)
    dot = jnp.sum(l * r, axis=-1)
    nl2 = jnp.sum(l * l, axis=-1)
    nr2 = jnp.sum(r * r, axis=-1)
    cos = dot / jnp.sqrt(jnp.maximum(nl2 * nr2, eps * eps))
    p = lefts.shape[0]
    target = jnp.concatenate([jnp.ones((p // 2,), jnp.float32),
                              jnp.zeros((p // 2,), jnp.float32)])
    return jnp.mean((cos - target) ** 2)


if __name__ == "__main__":
    key = jax.random.PRNGKey(0)
    k_data, k_w1, k_w2 = jax.random.split(key, 3)

    N, D_IN, D = 8, 16, 32          # 8 graph nodes, input dim 16, embedding dim 32
    P = 6                           # pairs: first P//2 aligned, rest anti-aligned

    data = jax.random.normal(k_data, (N, D_IN), dtype=jnp.float32)
    w1 = jax.random.normal(k_w1, (D_IN, D), dtype=jnp.float32) * 0.1
    w2 = jax.random.normal(k_w2, (D_IN, D), dtype=jnp.float32) * 0.1

    double_left_tensor = jnp.array([0, 1, 2, 3, 4, 5], dtype=jnp.int32)
    double_right_tensor = jnp.array([0, 1, 2, 5, 7, 6], dtype=jnp.int32)
    assert double_left_tensor.shape[0] == P

    loss = cosine_similarity_loss3(data, w1, w2,
                                   double_left_tensor, double_right_tensor)
    loss = jax.block_until_ready(loss)

    ref = _reference_loss(data, w1, w2, double_left_tensor, double_right_tensor)
    np.testing.assert_allclose(np.asarray(loss), np.asarray(ref),
                               rtol=1e-4, atol=1e-5)

    print("KERNEL_OK")
</pallas_src>

<mosaic_0001>
module attributes {stable_mosaic.version = 11 : i64} {
  func.func @_fused_cosine_mse_kernel(%arg0: i32, %arg1: memref<2xi32, #tpu.memory_space<smem>>, %arg2: memref<8xi32, #tpu.memory_space<smem>>, %arg3: memref<8xi32, #tpu.memory_space<smem>>, %arg4: memref<8x16xf32, #tpu.memory_space<vmem>>, %arg5: memref<16x32xf32, #tpu.memory_space<vmem>>, %arg6: memref<16x32xf32, #tpu.memory_space<vmem>>, %arg7: memref<8x128xf32, #tpu.memory_space<vmem>>, %arg8: memref<8x16xf32, #tpu.memory_space<vmem>>, %arg9: memref<8x16xf32, #tpu.memory_space<vmem>>) attributes {dimension_semantics = [#tpu.dimension_semantics<parallel>], iteration_bounds = array<i64: 1>, scalar_prefetch = 3 : i64, scratch_operands = 2 : i64, tpu.core_type = #tpu.core_type<tc>, window_params = [{pipeline_mode = #tpu.pipeline_mode<synchronous>, transform_indices = @transform_0, window_bounds = array<i64: 8, 16>}, {pipeline_mode = #tpu.pipeline_mode<synchronous>, transform_indices = @transform_1, window_bounds = array<i64: 16, 32>}, {pipeline_mode = #tpu.pipeline_mode<synchronous>, transform_indices = @transform_2, window_bounds = array<i64: 16, 32>}, {transform_indices = @transform_3, window_bounds = array<i64: 8, 128>}]} {
    %c0 = arith.constant 0 : index
    %0 = memref.load %arg1[%c0] : memref<2xi32, #tpu.memory_space<smem>>
    %c1 = arith.constant 1 : index
    %1 = memref.load %arg1[%c1] : memref<2xi32, #tpu.memory_space<smem>>
    %c8_i32 = arith.constant 8 : i32
    %2 = arith.muli %arg0, %c8_i32 : i32
    %c0_i32 = arith.constant 0 : i32
    %3 = arith.addi %2, %c0_i32 : i32
    %4 = arith.index_cast %3 : i32 to index
    %5 = memref.load %arg2[%4] : memref<8xi32, #tpu.memory_space<smem>>
    %6 = arith.addi %2, %c0_i32 : i32
    %7 = arith.index_cast %6 : i32 to index
    %8 = memref.load %arg3[%7] : memref<8xi32, #tpu.memory_space<smem>>
    %9 = arith.index_cast %5 : i32 to index
    %c0_0 = arith.constant 0 : index
    %10 = vector.load %arg4[%9, %c0_0] : memref<8x16xf32, #tpu.memory_space<vmem>>, vector<1x16xf32>
    %11 = arith.index_cast %c0_i32 : i32 to index
    %c0_1 = arith.constant 0 : index
    %12 = vector.load %arg8[%11, %c0_1] : memref<8x16xf32, #tpu.memory_space<vmem>>, vector<1x16xf32>
    tpu.vector_store %arg8[%11, %c0_1], %10 {strides = array<i32>} : memref<8x16xf32, #tpu.memory_space<vmem>>, vector<1x16xf32>,
    %13 = arith.index_cast %8 : i32 to index
    %c0_2 = arith.constant 0 : index
    %14 = vector.load %arg4[%13, %c0_2] : memref<8x16xf32, #tpu.memory_space<vmem>>, vector<1x16xf32>
    %15 = arith.index_cast %c0_i32 : i32 to index
    %c0_3 = arith.constant 0 : index
    %16 = vector.load %arg9[%15, %c0_3] : memref<8x16xf32, #tpu.memory_space<vmem>>, vector<1x16xf32>
    tpu.vector_store %arg9[%15, %c0_3], %14 {strides = array<i32>} : memref<8x16xf32, #tpu.memory_space<vmem>>, vector<1x16xf32>,
    %c1_i32 = arith.constant 1 : i32
    %17 = arith.addi %2, %c1_i32 : i32
    %18 = arith.index_cast %17 : i32 to index
    %19 = memref.load %arg2[%18] : memref<8xi32, #tpu.memory_space<smem>>
    %20 = arith.addi %2, %c1_i32 : i32
    %21 = arith.index_cast %20 : i32 to index
    %22 = memref.load %arg3[%21] : memref<8xi32, #tpu.memory_space<smem>>
    %23 = arith.index_cast %19 : i32 to index
    %c0_4 = arith.constant 0 : index
    %24 = vector.load %arg4[%23, %c0_4] : memref<8x16xf32, #tpu.memory_space<vmem>>, vector<1x16xf32>
    %25 = arith.index_cast %c1_i32 : i32 to index
    %c0_5 = arith.constant 0 : index
    %26 = vector.load %arg8[%25, %c0_5] : memref<8x16xf32, #tpu.memory_space<vmem>>, vector<1x16xf32>
    tpu.vector_store %arg8[%25, %c0_5], %24 {strides = array<i32>} : memref<8x16xf32, #tpu.memory_space<vmem>>, vector<1x16xf32>,
    %27 = arith.index_cast %22 : i32 to index
    %c0_6 = arith.constant 0 : index
    %28 = vector.load %arg4[%27, %c0_6] : memref<8x16xf32, #tpu.memory_space<vmem>>, vector<1x16xf32>
    %29 = arith.index_cast %c1_i32 : i32 to index
    %c0_7 = arith.constant 0 : index
    %30 = vector.load %arg9[%29, %c0_7] : memref<8x16xf32, #tpu.memory_space<vmem>>, vector<1x16xf32>
    tpu.vector_store %arg9[%29, %c0_7], %28 {strides = array<i32>} : memref<8x16xf32, #tpu.memory_space<vmem>>, vector<1x16xf32>,
    %c2_i32 = arith.constant 2 : i32
    %31 = arith.addi %2, %c2_i32 : i32
    %32 = arith.index_cast %31 : i32 to index
    %33 = memref.load %arg2[%32] : memref<8xi32, #tpu.memory_space<smem>>
    %34 = arith.addi %2, %c2_i32 : i32
    %35 = arith.index_cast %34 : i32 to index
    %36 = memref.load %arg3[%35] : memref<8xi32, #tpu.memory_space<smem>>
    %37 = arith.index_cast %33 : i32 to index
    %c0_8 = arith.constant 0 : index
    %38 = vector.load %arg4[%37, %c0_8] : memref<8x16xf32, #tpu.memory_space<vmem>>, vector<1x16xf32>
    %39 = arith.index_cast %c2_i32 : i32 to index
    %c0_9 = arith.constant 0 : index
    %40 = vector.load %arg8[%39, %c0_9] : memref<8x16xf32, #tpu.memory_space<vmem>>, vector<1x16xf32>
    tpu.vector_store %arg8[%39, %c0_9], %38 {strides = array<i32>} : memref<8x16xf32, #tpu.memory_space<vmem>>, vector<1x16xf32>,
    %41 = arith.index_cast %36 : i32 to index
    %c0_10 = arith.constant 0 : index
    %42 = vector.load %arg4[%41, %c0_10] : memref<8x16xf32, #tpu.memory_space<vmem>>, vector<1x16xf32>
    %43 = arith.index_cast %c2_i32 : i32 to index
    %c0_11 = arith.constant 0 : index
    %44 = vector.load %arg9[%43, %c0_11] : memref<8x16xf32, #tpu.memory_space<vmem>>, vector<1x16xf32>
    tpu.vector_store %arg9[%43, %c0_11], %42 {strides = array<i32>} : memref<8x16xf32, #tpu.memory_space<vmem>>, vector<1x16xf32>,
    %c3_i32 = arith.constant 3 : i32
    %45 = arith.addi %2, %c3_i32 : i32
    %46 = arith.index_cast %45 : i32 to index
    %47 = memref.load %arg2[%46] : memref<8xi32, #tpu.memory_space<smem>>
    %48 = arith.addi %2, %c3_i32 : i32
    %49 = arith.index_cast %48 : i32 to index
    %50 = memref.load %arg3[%49] : memref<8xi32, #tpu.memory_space<smem>>
    %51 = arith.index_cast %47 : i32 to index
    %c0_12 = arith.constant 0 : index
    %52 = vector.load %arg4[%51, %c0_12] : memref<8x16xf32, #tpu.memory_space<vmem>>, vector<1x16xf32>
    %53 = arith.index_cast %c3_i32 : i32 to index
    %c0_13 = arith.constant 0 : index
    %54 = vector.load %arg8[%53, %c0_13] : memref<8x16xf32, #tpu.memory_space<vmem>>, vector<1x16xf32>
    tpu.vector_store %arg8[%53, %c0_13], %52 {strides = array<i32>} : memref<8x16xf32, #tpu.memory_space<vmem>>, vector<1x16xf32>,
    %55 = arith.index_cast %50 : i32 to index
    %c0_14 = arith.constant 0 : index
    %56 = vector.load %arg4[%55, %c0_14] : memref<8x16xf32, #tpu.memory_space<vmem>>, vector<1x16xf32>
    %57 = arith.index_cast %c3_i32 : i32 to index
    %c0_15 = arith.constant 0 : index
    %58 = vector.load %arg9[%57, %c0_15] : memref<8x16xf32, #tpu.memory_space<vmem>>, vector<1x16xf32>
    tpu.vector_store %arg9[%57, %c0_15], %56 {strides = array<i32>} : memref<8x16xf32, #tpu.memory_space<vmem>>, vector<1x16xf32>,
    %c4_i32 = arith.constant 4 : i32
    %59 = arith.addi %2, %c4_i32 : i32
    %60 = arith.index_cast %59 : i32 to index
    %61 = memref.load %arg2[%60] : memref<8xi32, #tpu.memory_space<smem>>
    %62 = arith.addi %2, %c4_i32 : i32
    %63 = arith.index_cast %62 : i32 to index
    %64 = memref.load %arg3[%63] : memref<8xi32, #tpu.memory_space<smem>>
    %65 = arith.index_cast %61 : i32 to index
    %c0_16 = arith.constant 0 : index
    %66 = vector.load %arg4[%65, %c0_16] : memref<8x16xf32, #tpu.memory_space<vmem>>, vector<1x16xf32>
    %67 = arith.index_cast %c4_i32 : i32 to index
    %c0_17 = arith.constant 0 : index
    %68 = vector.load %arg8[%67, %c0_17] : memref<8x16xf32, #tpu.memory_space<vmem>>, vector<1x16xf32>
    tpu.vector_store %arg8[%67, %c0_17], %66 {strides = array<i32>} : memref<8x16xf32, #tpu.memory_space<vmem>>, vector<1x16xf32>,
    %69 = arith.index_cast %64 : i32 to index
    %c0_18 = arith.constant 0 : index
    %70 = vector.load %arg4[%69, %c0_18] : memref<8x16xf32, #tpu.memory_space<vmem>>, vector<1x16xf32>
    %71 = arith.index_cast %c4_i32 : i32 to index
    %c0_19 = arith.constant 0 : index
    %72 = vector.load %arg9[%71, %c0_19] : memref<8x16xf32, #tpu.memory_space<vmem>>, vector<1x16xf32>
    tpu.vector_store %arg9[%71, %c0_19], %70 {strides = array<i32>} : memref<8x16xf32, #tpu.memory_space<vmem>>, vector<1x16xf32>,
    %c5_i32 = arith.constant 5 : i32
    %73 = arith.addi %2, %c5_i32 : i32
    %74 = arith.index_cast %73 : i32 to index
    %75 = memref.load %arg2[%74] : memref<8xi32, #tpu.memory_space<smem>>
    %76 = arith.addi %2, %c5_i32 : i32
    %77 = arith.index_cast %76 : i32 to index
    %78 = memref.load %arg3[%77] : memref<8xi32, #tpu.memory_space<smem>>
    %79 = arith.index_cast %75 : i32 to index
    %c0_20 = arith.constant 0 : index
    %80 = vector.load %arg4[%79, %c0_20] : memref<8x16xf32, #tpu.memory_space<vmem>>, vector<1x16xf32>
    %81 = arith.index_cast %c5_i32 : i32 to index
    %c0_21 = arith.constant 0 : index
    %82 = vector.load %arg8[%81, %c0_21] : memref<8x16xf32, #tpu.memory_space<vmem>>, vector<1x16xf32>
    tpu.vector_store %arg8[%81, %c0_21], %80 {strides = array<i32>} : memref<8x16xf32, #tpu.memory_space<vmem>>, vector<1x16xf32>,
    %83 = arith.index_cast %78 : i32 to index
    %c0_22 = arith.constant 0 : index
    %84 = vector.load %arg4[%83, %c0_22] : memref<8x16xf32, #tpu.memory_space<vmem>>, vector<1x16xf32>
    %85 = arith.index_cast %c5_i32 : i32 to index
    %c0_23 = arith.constant 0 : index
    %86 = vector.load %arg9[%85, %c0_23] : memref<8x16xf32, #tpu.memory_space<vmem>>, vector<1x16xf32>
    tpu.vector_store %arg9[%85, %c0_23], %84 {strides = array<i32>} : memref<8x16xf32, #tpu.memory_space<vmem>>, vector<1x16xf32>,
    %c6_i32 = arith.constant 6 : i32
    %87 = arith.addi %2, %c6_i32 : i32
    %88 = arith.index_cast %87 : i32 to index
    %89 = memref.load %arg2[%88] : memref<8xi32, #tpu.memory_space<smem>>
    %90 = arith.addi %2, %c6_i32 : i32
    %91 = arith.index_cast %90 : i32 to index
    %92 = memref.load %arg3[%91] : memref<8xi32, #tpu.memory_space<smem>>
    %93 = arith.index_cast %89 : i32 to index
    %c0_24 = arith.constant 0 : index
    %94 = vector.load %arg4[%93, %c0_24] : memref<8x16xf32, #tpu.memory_space<vmem>>, vector<1x16xf32>
    %95 = arith.index_cast %c6_i32 : i32 to index
    %c0_25 = arith.constant 0 : index
    %96 = vector.load %arg8[%95, %c0_25] : memref<8x16xf32, #tpu.memory_space<vmem>>, vector<1x16xf32>
    tpu.vector_store %arg8[%95, %c0_25], %94 {strides = array<i32>} : memref<8x16xf32, #tpu.memory_space<vmem>>, vector<1x16xf32>,
    %97 = arith.index_cast %92 : i32 to index
    %c0_26 = arith.constant 0 : index
    %98 = vector.load %arg4[%97, %c0_26] : memref<8x16xf32, #tpu.memory_space<vmem>>, vector<1x16xf32>
    %99 = arith.index_cast %c6_i32 : i32 to index
    %c0_27 = arith.constant 0 : index
    %100 = vector.load %arg9[%99, %c0_27] : memref<8x16xf32, #tpu.memory_space<vmem>>, vector<1x16xf32>
    tpu.vector_store %arg9[%99, %c0_27], %98 {strides = array<i32>} : memref<8x16xf32, #tpu.memory_space<vmem>>, vector<1x16xf32>,
    %c7_i32 = arith.constant 7 : i32
    %101 = arith.addi %2, %c7_i32 : i32
    %102 = arith.index_cast %101 : i32 to index
    %103 = memref.load %arg2[%102] : memref<8xi32, #tpu.memory_space<smem>>
    %104 = arith.addi %2, %c7_i32 : i32
    %105 = arith.index_cast %104 : i32 to index
    %106 = memref.load %arg3[%105] : memref<8xi32, #tpu.memory_space<smem>>
    %107 = arith.index_cast %103 : i32 to index
    %c0_28 = arith.constant 0 : index
    %108 = vector.load %arg4[%107, %c0_28] : memref<8x16xf32, #tpu.memory_space<vmem>>, vector<1x16xf32>
    %109 = arith.index_cast %c7_i32 : i32 to index
    %c0_29 = arith.constant 0 : index
    %110 = vector.load %arg8[%109, %c0_29] : memref<8x16xf32, #tpu.memory_space<vmem>>, vector<1x16xf32>
    tpu.vector_store %arg8[%109, %c0_29], %108 {strides = array<i32>} : memref<8x16xf32, #tpu.memory_space<vmem>>, vector<1x16xf32>,
    %111 = arith.index_cast %106 : i32 to index
    %c0_30 = arith.constant 0 : index
    %112 = vector.load %arg4[%111, %c0_30] : memref<8x16xf32, #tpu.memory_space<vmem>>, vector<1x16xf32>
    %113 = arith.index_cast %c7_i32 : i32 to index
    %c0_31 = arith.constant 0 : index
    %114 = vector.load %arg9[%113, %c0_31] : memref<8x16xf32, #tpu.memory_space<vmem>>, vector<1x16xf32>
    tpu.vector_store %arg9[%113, %c0_31], %112 {strides = array<i32>} : memref<8x16xf32, #tpu.memory_space<vmem>>, vector<1x16xf32>,
    %c8_i32_32 = arith.constant 8 : i32
    %c0_33 = arith.constant 0 : index
    %c0_34 = arith.constant 0 : index
    %115 = vector.load %arg8[%c0_33, %c0_34] : memref<8x16xf32, #tpu.memory_space<vmem>>, vector<8x16xf32>
    %c0_35 = arith.constant 0 : index
    %c0_36 = arith.constant 0 : index
    %116 = vector.load %arg5[%c0_35, %c0_36] : memref<16x32xf32, #tpu.memory_space<vmem>>, vector<16x32xf32>
    %cst = arith.constant dense<0.000000e+00> : vector<8x32xf32>
    %117 = tpu.matmul %115, %116, %cst {dimension_numbers = #tpu.dot_dimension_numbers<[1], [0], [0], [1], [0, 0, 1, 1], [], []>, precision = #tpu.contract_precision<fp32>} : vector<8x16xf32>, vector<16x32xf32>, vector<8x32xf32> -> vector<8x32xf32>
    %c0_37 = arith.constant 0 : index
    %c0_38 = arith.constant 0 : index
    %118 = vector.load %arg9[%c0_37, %c0_38] : memref<8x16xf32, #tpu.memory_space<vmem>>, vector<8x16xf32>
    %c0_39 = arith.constant 0 : index
    %c0_40 = arith.constant 0 : index
    %119 = vector.load %arg6[%c0_39, %c0_40] : memref<16x32xf32, #tpu.memory_space<vmem>>, vector<16x32xf32>
    %cst_41 = arith.constant dense<0.000000e+00> : vector<8x32xf32>
    %120 = tpu.matmul %118, %119, %cst_41 {dimension_numbers = #tpu.dot_dimension_numbers<[1], [0], [0], [1], [0, 0, 1, 1], [], []>, precision = #tpu.contract_precision<fp32>} : vector<8x16xf32>, vector<16x32xf32>, vector<8x32xf32> -> vector<8x32xf32>
    %121 = arith.mulf %117, %120 : vector<8x32xf32>
    %cst_42 = arith.constant dense<0.000000e+00> : vector<8xf32>
    %122 = vector.multi_reduction <add>, %121, %cst_42 [1] : vector<8x32xf32> to vector<8xf32>
    %123 = vector.shape_cast %122 : vector<8xf32> to vector<8x1xf32>
    %124 = arith.mulf %117, %117 : vector<8x32xf32>
    %cst_43 = arith.constant dense<0.000000e+00> : vector<8xf32>
    %125 = vector.multi_reduction <add>, %124, %cst_43 [1] : vector<8x32xf32> to vector<8xf32>
    %126 = vector.shape_cast %125 : vector<8xf32> to vector<8x1xf32>
    %127 = arith.mulf %120, %120 : vector<8x32xf32>
    %cst_44 = arith.constant dense<0.000000e+00> : vector<8xf32>
    %128 = vector.multi_reduction <add>, %127, %cst_44 [1] : vector<8x32xf32> to vector<8xf32>
    %129 = vector.shape_cast %128 : vector<8xf32> to vector<8x1xf32>
    %130 = arith.mulf %126, %129 : vector<8x1xf32>
    %cst_45 = arith.constant 9.99999993E-9 : f32
    %cst_46 = arith.constant 9.99999993E-9 : f32
    %131 = arith.mulf %cst_45, %cst_46 : f32
    %132 = vector.broadcast %131 : f32 to vector<8x1xf32>
    %133 = arith.maximumf %130, %132 : vector<8x1xf32>
    %134 = math.rsqrt %133 : vector<8x1xf32>
    %135 = arith.mulf %123, %134 : vector<8x1xf32>
    %136 = tpu.iota {dimensions = array<i32: 0>} : vector<8x1xi32>
    %137 = vector.broadcast %2 : i32 to vector<8x1xi32>
    %138 = arith.addi %136, %137 : vector<8x1xi32>
    %139 = vector.broadcast %0 : i32 to vector<8x1xi32>
    %140 = arith.cmpi slt, %138, %139 : vector<8x1xi32>
    %cst_47 = arith.constant 1.000000e+00 : f32
    %cst_48 = arith.constant 0.000000e+00 : f32
    %141 = vector.broadcast %cst_47 : f32 to vector<8x1xf32>
    %142 = vector.broadcast %cst_48 : f32 to vector<8x1xf32>
    %143 = arith.select %140, %141, %142 : vector<8x1xi1>, vector<8x1xf32>
    %144 = vector.broadcast %1 : i32 to vector<8x1xi32>
    %145 = arith.cmpi slt, %138, %144 : vector<8x1xi32>
    %146 = arith.extui %145 : vector<8x1xi1> to vector<8x1xi32>
    %147 = arith.sitofp %146 : vector<8x1xi32> to vector<8x1xf32>
    %148 = arith.subf %135, %143 : vector<8x1xf32>
    %149 = arith.mulf %148, %147 : vector<8x1xf32>
    %150 = arith.mulf %149, %149 : vector<8x1xf32>
    %151 = vector.shape_cast %150 : vector<8x1xf32> to vector<1x8x1xf32>
    %cst_49 = arith.constant dense<0.000000e+00> : vector<1xf32>
    %152 = vector.multi_reduction <add>, %151, %cst_49 [1, 2] : vector<1x8x1xf32> to vector<1xf32>
    %153 = vector.shape_cast %152 : vector<1xf32> to vector<1x1x1xf32>
    %154 = vector.extract %153[0, 0, 0] : f32 from vector<1x1x1xf32>
    %155 = vector.broadcast %154 : f32 to vector<1x1xf32>
    %156 = tpu.iota {dimensions = array<i32: 0>} : vector<8x128xi32>
    %157 = tpu.iota {dimensions = array<i32: 1>} : vector<8x128xi32>
    %c0_i32_50 = arith.constant 0 : i32
    %158 = vector.broadcast %c0_i32_50 : i32 to vector<8x128xi32>
    %159 = arith.cmpi eq, %156, %158 : vector<8x128xi32>
    %c0_i32_51 = arith.constant 0 : i32
    %160 = vector.broadcast %c0_i32_51 : i32 to vector<8x128xi32>
    %161 = arith.cmpi eq, %157, %160 : vector<8x128xi32>
    %162 = arith.andi %159, %161 : vector<8x128xi1>
    %cst_52 = arith.constant 0.000000e+00 : f32
    %163 = vector.shape_cast %155 : vector<1x1xf32> to vector<1x1xf32>
    %164 = vector.broadcast %163 : vector<1x1xf32> to vector<8x128xf32>
    %165 = vector.broadcast %cst_52 : f32 to vector<8x128xf32>
    %166 = arith.select %162, %164, %165 : vector<8x128xi1>, vector<8x128xf32>
    %c0_53 = arith.constant 0 : index
    %c0_54 = arith.constant 0 : index
    %167 = vector.load %arg7[%c0_53, %c0_54] : memref<8x128xf32, #tpu.memory_space<vmem>>, vector<8x128xf32>
    tpu.vector_store %arg7[%c0_53, %c0_54], %166 {strides = array<i32>} : memref<8x128xf32, #tpu.memory_space<vmem>>, vector<8x128xf32>,
    return
  }
  func.func @transform_0(%arg0: i32, %arg1: memref<2xi32, #tpu.memory_space<smem>>, %arg2: memref<8xi32, #tpu.memory_space<smem>>, %arg3: memref<8xi32, #tpu.memory_space<smem>>) -> (i32, i32) {
    %c0_i32 = arith.constant 0 : i32
    %c0_i32_0 = arith.constant 0 : i32
    %c0_i32_1 = arith.constant 0 : i32
    return %c0_i32, %c0_i32_0 : i32, i32
  }
  func.func @transform_1(%arg0: i32, %arg1: memref<2xi32, #tpu.memory_space<smem>>, %arg2: memref<8xi32, #tpu.memory_space<smem>>, %arg3: memref<8xi32, #tpu.memory_space<smem>>) -> (i32, i32) {
    %c0_i32 = arith.constant 0 : i32
    %c0_i32_0 = arith.constant 0 : i32
    %c0_i32_1 = arith.constant 0 : i32
    return %c0_i32, %c0_i32_0 : i32, i32
  }
  func.func @transform_2(%arg0: i32, %arg1: memref<2xi32, #tpu.memory_space<smem>>, %arg2: memref<8xi32, #tpu.memory_space<smem>>, %arg3: memref<8xi32, #tpu.memory_space<smem>>) -> (i32, i32) {
    %c0_i32 = arith.constant 0 : i32
    %c0_i32_0 = arith.constant 0 : i32
    %c0_i32_1 = arith.constant 0 : i32
    return %c0_i32, %c0_i32_0 : i32, i32
  }
  func.func @transform_3(%arg0: i32, %arg1: memref<2xi32, #tpu.memory_space<smem>>, %arg2: memref<8xi32, #tpu.memory_space<smem>>, %arg3: memref<8xi32, #tpu.memory_space<smem>>) -> (i32, i32) {
    %c0_i32 = arith.constant 0 : i32
    %c0_i32_0 = arith.constant 0 : i32
    return %arg0, %c0_i32 : i32, i32
  }
}

</mosaic_0001>

<llo_original>
// kernel: tpu_custom_call.1
$region0: #{tpu_custom_call.1}
  #allocation0 [shape = 'u32[]', space=smem, size = 0x4, offset = 0x4, fixed_abs, tag = 'smem constant byte address 0x4 - core index']
  #allocation1 [shape = 'u32[144,128]{1,0:T(1,128)}', space=vmem, size = 0x12000, scoped, tag = 'internal scratch']
  #allocation2 [shape = 'f32[8,16]{1,0:T(8,128)}', space=vmem, size = 0x1000, scoped, tag = 'scratch operand']
  #allocation3 [shape = 'f32[8,16]{1,0:T(8,128)}', space=vmem, size = 0x1000, scoped, tag = 'scratch operand']
  #allocation4 [shape = 's32[1]{0}', space=sflag, size = 0x4, scoped, tag = 'scoped memory for tpu_custom_call.1']
  #allocation5 [shape = 'u8[512]{0}', space=smem, size = 0x200, scoped, tag = 'prefetched SMEM operand 0']
  #allocation6 [shape = 'u8[512]{0}', space=smem, size = 0x200, scoped, tag = 'prefetched SMEM operand 1']
  #allocation7 [shape = 'u8[512]{0}', space=smem, size = 0x200, scoped, tag = 'prefetched SMEM operand 2']
  %s0 = inlined_call_operand.hbm [shape: s32[2], index: 0, kind: input, shape index: {}]
  %s1 = inlined_call_operand.vmem [shape: s32[8], index: 1, kind: input, shape index: {}]
  %s2 = inlined_call_operand.vmem [shape: s32[8], index: 2, kind: input, shape index: {}]
  %s3 = inlined_call_operand.hbm [shape: f32[8,16], index: 3, kind: input, shape index: {}]
  %s4 = inlined_call_operand.hbm [shape: f32[16,32], index: 4, kind: input, shape index: {}]
  %s5 = inlined_call_operand.vmem [shape: f32[16,32], index: 5, kind: input, shape index: {}]
  %s6 = inlined_call_operand.hbm [shape: f32[8,128], index: 6, kind: output, shape index: {}]
  %s7 = sld [smem:[#allocation0]]
  $region30: #{tpu_custom_call.1} parent=0
    _
  %s9 = ssub.s32 1, %s7
  %s10 = scalar_select 0, %s9, %s7
  %12 = dma.hbm_to_smem %s0, 16, [#allocation5], [#allocation4]
  %s13 = sshll.u32 %s1, 4
  %s14 = int_to_ptr.vmem [resolvable:$true] %s13
  %16 = dma.vmem_to_smem %s14, 16, [#allocation6], [#allocation4]
  %s17 = sshll.u32 %s2, 4
  %s18 = int_to_ptr.vmem [resolvable:$true] %s17
  %20 = dma.vmem_to_smem %s18, 16, [#allocation7], [#allocation4]
  %21 = dma.done [#allocation4], 48
  %22 = sfence
  $region1: #{tpu_custom_call.1} parent=0
    #allocation8 [shape = 'u8[4096]{0}', space=vmem, size = 0x1000, scoped, tag = 'input window, operand 3, single buffered']
    #allocation9 [shape = 's32[1]{0}', space=sflag, size = 0x4, scoped, tag = 'scoped memory for tpu_custom_call.1']
    #allocation10 [shape = 's32[1]{0}', space=sflag, size = 0x4, scoped, tag = 'scoped memory for tpu_custom_call.1']
    #allocation11 [shape = 'u8[8192]{0}', space=vmem, size = 0x2000, scoped, tag = 'input window, operand 4, single buffered']
    #allocation12 [shape = 's32[1]{0}', space=sflag, size = 0x4, scoped, tag = 'scoped memory for tpu_custom_call.1']
    #allocation13 [shape = 'u8[4096]{0}', space=vmem, size = 0x1000, scoped, tag = 'output window, operand 0, single buffered']
    %23 = vsyncpa [#allocation9], 0
    %24 = vsyncpa [#allocation12], 0
    %25 = vsyncpa [#allocation10], 0
    // Predicated region
    $region2: #{tpu_custom_call.1} parent=1 // pred_check
      _
    $region3: #{tpu_custom_call.1} parent=1 // pred_check_branch
      %27 = sbr.rel (0) target = $region5
    $region4: #{tpu_custom_call.1} parent=1 // pred_region
      %s29 = ssub.s32 128, 128
      %30 = vsyncadd [#allocation9], %s29
      %s32 = sshll.u32 [#allocation8], 4
      %s33 = int_to_ptr.vmem [resolvable:$true] %s32
      %35 = dma.hbm_to_vmem [thread:$0]  %s3, 128, %s33, [#allocation9]
    $region5: #{tpu_custom_call.1} parent=1 // pred_fallthru
      _
    // Predicated region
    $region6: #{tpu_custom_call.1} parent=1 // pred_check
      _
    $region7: #{tpu_custom_call.1} parent=1 // pred_check_branch
      %37 = sbr.rel (0) target = $region9
    $region8: #{tpu_custom_call.1} parent=1 // pred_region
      %s39 = ssub.s32 256, 256
      %40 = vsyncadd [#allocation12], %s39
      %s41 = sshll.u32 [#allocation11], 4
      %s42 = int_to_ptr.vmem [resolvable:$true] %s41
      %47 = dma.hbm_to_vmem [thread:$0]  %s4, 256, %s42, [#allocation12], 128, 128, 8
    $region9: #{tpu_custom_call.1} parent=1 // pred_fallthru
      _
    // Predicated region
    $region10: #{tpu_custom_call.1} parent=1 // pred_check
      _
    $region11: #{tpu_custom_call.1} parent=1 // pred_check_branch
      %49 = sbr.rel (0) target = $region13
    $region12: #{tpu_custom_call.1} parent=1 // pred_region
      _
    $region13: #{tpu_custom_call.1} parent=1 // pred_fallthru
      _
    // Predicated region
    $region14: #{tpu_custom_call.1} parent=1 // pred_check
      _
    $region15: #{tpu_custom_call.1} parent=1 // pred_check_branch
      %51 = sbr.rel (0) target = $region17
    $region16: #{tpu_custom_call.1} parent=1 // pred_region
      %52 = dma.done [#allocation9], 128
    $region17: #{tpu_custom_call.1} parent=1 // pred_fallthru
      _
    // Predicated region
    $region18: #{tpu_custom_call.1} parent=1 // pred_check
      _
    $region19: #{tpu_custom_call.1} parent=1 // pred_check_branch
      %54 = sbr.rel (0) target = $region21
    $region20: #{tpu_custom_call.1} parent=1 // pred_region
      %55 = dma.done [#allocation12], 256
    $region21: #{tpu_custom_call.1} parent=1 // pred_fallthru
      _
    %s56 = sld [smem:[#allocation5]]
    %s57 = sld [smem:[#allocation5 + $0x1]]
    %s58 = smul.u32 0, 8
    %s59 = sld [smem:[#allocation6 + %s58]]
    %s60 = sld [smem:[#allocation7 + %s58]]
    %s61 = scalar_lea.vmem [#allocation8], %s59
    %v62 = vld [vmem:[%s61] sm:$0x1]
    %vm63 = vcmask 122880
    %64 = vst.msk [vmem:[#allocation2] sm:$0x1] %vm63, %v62
    %s65 = scalar_lea.vmem [#allocation8], %s60
    %v66 = vld [vmem:[%s65] sm:$0x1]
    %67 = vst.msk [vmem:[#allocation3] sm:$0x1] %vm63, %v66
    %s68 = sadd.s32 %s58, 1
    %s69 = sld [smem:[#allocation6 + %s68]]
    %s70 = sld [smem:[#allocation7 + %s68]]
    %s71 = scalar_lea.vmem [#allocation8], %s69
    %v72 = vld [vmem:[%s71] sm:$0x1]
    %73 = vst.msk [vmem:[#allocation2 + $0x1] sm:$0x1] %vm63, %v72
    %s74 = scalar_lea.vmem [#allocation8], %s70
    %v75 = vld [vmem:[%s74] sm:$0x1]
    %76 = vst.msk [vmem:[#allocation3 + $0x1] sm:$0x1] %vm63, %v75
    %s77 = sadd.s32 %s58, 2
    %s78 = sld [smem:[#allocation6 + %s77]]
    %s79 = sld [smem:[#allocation7 + %s77]]
    %s80 = scalar_lea.vmem [#allocation8], %s78
    %v81 = vld [vmem:[%s80] sm:$0x1]
    %82 = vst.msk [vmem:[#allocation2 + $0x2] sm:$0x1] %vm63, %v81
    %s83 = scalar_lea.vmem [#allocation8], %s79
    %v84 = vld [vmem:[%s83] sm:$0x1]
    %85 = vst.msk [vmem:[#allocation3 + $0x2] sm:$0x1] %vm63, %v84
    %s86 = sadd.s32 %s58, 3
    %s87 = sld [smem:[#allocation6 + %s86]]
    %s88 = sld [smem:[#allocation7 + %s86]]
    %s89 = scalar_lea.vmem [#allocation8], %s87
    %v90 = vld [vmem:[%s89] sm:$0x1]
    %91 = vst.msk [vmem:[#allocation2 + $0x3] sm:$0x1] %vm63, %v90
    %s92 = scalar_lea.vmem [#allocation8], %s88
    %v93 = vld [vmem:[%s92] sm:$0x1]
    %94 = vst.msk [vmem:[#allocation3 + $0x3] sm:$0x1] %vm63, %v93
    %s95 = sadd.s32 %s58, 4
    %s96 = sld [smem:[#allocation6 + %s95]]
    %s97 = sld [smem:[#allocation7 + %s95]]
    %s98 = scalar_lea.vmem [#allocation8], %s96
    %v99 = vld [vmem:[%s98] sm:$0x1]
    %100 = vst.msk [vmem:[#allocation2 + $0x4] sm:$0x1] %vm63, %v99
    %s101 = scalar_lea.vmem [#allocation8], %s97
    %v102 = vld [vmem:[%s101] sm:$0x1]
    %103 = vst.msk [vmem:[#allocation3 + $0x4] sm:$0x1] %vm63, %v102
    %s104 = sadd.s32 %s58, 5
    %s105 = sld [smem:[#allocation6 + %s104]]
    %s106 = sld [smem:[#allocation7 + %s104]]
    %s107 = scalar_lea.vmem [#allocation8], %s105
    %v108 = vld [vmem:[%s107] sm:$0x1]
    %109 = vst.msk [vmem:[#allocation2 + $0x5] sm:$0x1] %vm63, %v108
    %s110 = scalar_lea.vmem [#allocation8], %s106
    %v111 = vld [vmem:[%s110] sm:$0x1]
    %112 = vst.msk [vmem:[#allocation3 + $0x5] sm:$0x1] %vm63, %v111
    %s113 = sadd.s32 %s58, 6
    %s114 = sld [smem:[#allocation6 + %s113]]
    %s115 = sld [smem:[#allocation7 + %s113]]
    %s116 = scalar_lea.vmem [#allocation8], %s114
    %v117 = vld [vmem:[%s116] sm:$0x1]
    %118 = vst.msk [vmem:[#allocation2 + $0x6] sm:$0x1] %vm63, %v117
    %s119 = scalar_lea.vmem [#allocation8], %s115
    %v120 = vld [vmem:[%s119] sm:$0x1]
    %121 = vst.msk [vmem:[#allocation3 + $0x6] sm:$0x1] %vm63, %v120
    %s122 = sadd.s32 %s58, 7
    %s123 = sld [smem:[#allocation6 + %s122]]
    %s124 = sld [smem:[#allocation7 + %s122]]
    %s125 = scalar_lea.vmem [#allocation8], %s123
    %v126 = vld [vmem:[%s125] sm:$0x1]
    %127 = vst.msk [vmem:[#allocation2 + $0x7] sm:$0x1] %vm63, %v126
    %s128 = scalar_lea.vmem [#allocation8], %s124
    %v129 = vld [vmem:[%s128] sm:$0x1]
    %130 = vst.msk [vmem:[#allocation3 + $0x7] sm:$0x1] %vm63, %v129
    %v131 = vld [vmem:[#allocation2] sm:$0xff]
    %v132 = vld [vmem:[#allocation11] sm:$0xff]
    %v133 = vld [vmem:[#allocation11 + $0x8] sm:$0xff]
    %vm134 = vcmask 130048
    %v136 = vsel %vm134, %v131, 0
    %138 = vmatprep.subr.mxu0 0.0
    %v139 = vand.u32 %v132, 4294901760
    %140 = vmatpush1.msra.mxu0 %v139
    %141 = vmatprep.subr.mxu0 0.0
    %v142 = vand.u32 %v133, 4294901760
    %143 = vmatpush1.msra.mxu0 %v142
    %144 = vmatprep.subr.mxu0 0.0
    %145 = vmatpush1.msra.mxu0 0.0
    %146 = vmatprep.subr.mxu0 0.0
    %147 = vmatpush1.msra.mxu0 0.0
    %148 = vmatprep.subr.mxu0 0.0
    %149 = vmatpush1.msra.mxu0 0.0
    %150 = vmatprep.subr.mxu0 0.0
    %151 = vmatpush1.msra.mxu0 0.0
    %152 = vmatprep.subr.mxu0 0.0
    %153 = vmatpush1.msra.mxu0 0.0
    %154 = vmatprep.subr.mxu0 0.0
    %155 = vmatpush1.msra.mxu0 0.0
    %156 = vmatprep.subr.mxu0 0.0
    %157 = vmatpush1.msra.mxu0 0.0
    %158 = vmatprep.subr.mxu0 0.0
    %159 = vmatpush1.msra.mxu0 0.0
    %160 = vmatprep.subr.mxu0 0.0
    %161 = vmatpush1.msra.mxu0 0.0
    %162 = vmatprep.subr.mxu0 0.0
    %163 = vmatpush1.msra.mxu0 0.0
    %164 = vmatprep.subr.mxu0 0.0
    %165 = vmatpush1.msra.mxu0 0.0
    %166 = vmatprep.subr.mxu0 0.0
    %167 = vmatpush1.msra.mxu0 0.0
    %168 = vmatprep.subr.mxu0 0.0
    %169 = vmatpush1.msra.mxu0 0.0
    %170 = vmatprep.subr.mxu0 0.0
    %171 = vmatpush1.msra.mxu0 0.0
    %172 = vmatprep.subr.mxu0 0.0
    %173 = vmatpush1.msra.mxu0 0.0
    %174 = vmatprep.subr.mxu0 0.0
    %175 = vmatpush1.msra.mxu0 0.0
    %176 = vmatprep.subr.mxu0 0.0
    %177 = vmatpush1.msra.mxu0 0.0
    %178 = vmatprep.subr.mxu0 0.0
    %179 = vmatpush1.msra.mxu0 0.0
    %180 = vmatprep.subr.mxu0 0.0
    %181 = vmatpush1.msra.mxu0 0.0
    %182 = vmatprep.subr.mxu0 0.0
    %183 = vmatpush1.msra.mxu0 0.0
    %184 = vmatprep.subr.mxu0 0.0
    %185 = vmatpush1.msra.mxu0 0.0
    %186 = vmatprep.subr.mxu0 0.0
    %187 = vmatpush1.msra.mxu0 0.0
    %188 = vmatprep.subr.mxu0 0.0
    %189 = vmatpush1.msra.mxu0 0.0
    %190 = vmatprep.subr.mxu0 0.0
    %191 = vmatpush1.msra.mxu0 0.0
    %192 = vmatprep.subr.mxu0 0.0
    %193 = vmatpush1.msra.mxu0 0.0
    %194 = vmatprep.subr.mxu0 0.0
    %195 = vmatpush1.msra.mxu0 0.0
    %196 = vmatprep.subr.mxu0 0.0
    %197 = vmatpush1.msra.mxu0 0.0
    %198 = vmatprep.subr.mxu0 0.0
    %199 = vmatpush1.msra.mxu0 0.0
    %200 = vmatprep.subr.mxu0 0.0
    %201 = vmatpush1.msra.mxu0 0.0
    %202 = vmatprep.subr.mxu0 0.0
    %203 = vmatpush1.msra.mxu0 0.0
    %204 = vmatprep.mubr.f32.mxu0 0.0
    %v205 = vand.u32 %v136, 4294901760
    %v206 = vsub.f32 %v136, %v205
    %v207 = vand.u32 %v206, 4294901760
    %v208 = vsub.f32 %v206, %v207
    %v209 = vand.u32 %v208, 4294901760
    %210 = vmatmul.mubr.f32.gmra.mrb[0].mxu0 %v209
    %v211 = vpop.f32.mrb[0].mxu0
    %v212 = vadd.f32 0.0, %v211
    %v213 = vpop.f32.mrb[0].mxu0
    %214 = vdwg.mxu0
    %215 = vmatprep.subr.mxu0 0.0
    %v216 = vand.u32 %v132, 4294901760
    %v217 = vsub.f32 %v132, %v216
    %v218 = vand.u32 %v217, 4294901760
    %v219 = vsub.f32 %v217, %v218
    %v220 = vand.u32 %v219, 4294901760
    %221 = vmatpush1.msra.mxu0 %v220
    %222 = vmatprep.subr.mxu0 0.0
    %v223 = vand.u32 %v133, 4294901760
    %v224 = vsub.f32 %v133, %v223
    %v225 = vand.u32 %v224, 4294901760
    %v226 = vsub.f32 %v224, %v225
    %v227 = vand.u32 %v226, 4294901760
    %228 = vmatpush1.msra.mxu0 %v227
    %229 = vmatprep.subr.mxu0 0.0
    %230 = vmatpush1.msra.mxu0 0.0
    %231 = vmatprep.subr.mxu0 0.0
    %232 = vmatpush1.msra.mxu0 0.0
    %233 = vmatprep.subr.mxu0 0.0
    %234 = vmatpush1.msra.mxu0 0.0
    %235 = vmatprep.subr.mxu0 0.0
    %236 = vmatpush1.msra.mxu0 0.0
    %237 = vmatprep.subr.mxu0 0.0
    %238 = vmatpush1.msra.mxu0 0.0
    %239 = vmatprep.subr.mxu0 0.0
    %240 = vmatpush1.msra.mxu0 0.0
    %241 = vmatprep.subr.mxu0 0.0
    %242 = vmatpush1.msra.mxu0 0.0
    %243 = vmatprep.subr.mxu0 0.0
    %244 = vmatpush1.msra.mxu0 0.0
    %245 = vmatprep.subr.mxu0 0.0
    %246 = vmatpush1.msra.mxu0 0.0
    %247 = vmatprep.subr.mxu0 0.0
    %248 = vmatpush1.msra.mxu0 0.0
    %249 = vmatprep.subr.mxu0 0.0
    %250 = vmatpush1.msra.mxu0 0.0
    %251 = vmatprep.subr.mxu0 0.0
    %252 = vmatpush1.msra.mxu0 0.0
    %253 = vmatprep.subr.mxu0 0.0
    %254 = vmatpush1.msra.mxu0 0.0
    %255 = vmatprep.subr.mxu0 0.0
    %256 = vmatpush1.msra.mxu0 0.0
    %257 = vmatprep.subr.mxu0 0.0
    %258 = vmatpush1.msra.mxu0 0.0
    %259 = vmatprep.subr.mxu0 0.0
    %260 = vmatpush1.msra.mxu0 0.0
    %261 = vmatprep.subr.mxu0 0.0
    %262 = vmatpush1.msra.mxu0 0.0
    %263 = vmatprep.subr.mxu0 0.0
    %264 = vmatpush1.msra.mxu0 0.0
    %265 = vmatprep.subr.mxu0 0.0
    %266 = vmatpush1.msra.mxu0 0.0
    %267 = vmatprep.subr.mxu0 0.0
    %268 = vmatpush1.msra.mxu0 0.0
    %269 = vmatprep.subr.mxu0 0.0
    %270 = vmatpush1.msra.mxu0 0.0
    %271 = vmatprep.subr.mxu0 0.0
    %272 = vmatpush1.msra.mxu0 0.0
    %273 = vmatprep.subr.mxu0 0.0
    %274 = vmatpush1.msra.mxu0 0.0
    %275 = vmatprep.subr.mxu0 0.0
    %276 = vmatpush1.msra.mxu0 0.0
    %277 = vmatprep.subr.mxu0 0.0
    %278 = vmatpush1.msra.mxu0 0.0
    %279 = vmatprep.subr.mxu0 0.0
    %280 = vmatpush1.msra.mxu0 0.0
    %281 = vmatprep.subr.mxu0 0.0
    %282 = vmatpush1.msra.mxu0 0.0
    %283 = vmatprep.subr.mxu0 0.0
    %284 = vmatpush1.msra.mxu0 0.0
    %285 = vmatprep.subr.mxu0 0.0
    %286 = vmatpush1.msra.mxu0 0.0
    %287 = vmatprep.subr.mxu0 0.0
    %288 = vmatpush1.msra.mxu0 0.0
    %289 = vmatprep.mubr.f32.mxu0 0.0
    %v290 = vand.u32 %v136, 4294901760
    %291 = vmatmul.mubr.f32.gmra.mrb[0].mxu0 %v290
    %v292 = vpop.f32.mrb[0].mxu0
    %v293 = vadd.f32 %v212, %v292
    %v294 = vpop.f32.mrb[0].mxu0
    %295 = vdwg.mxu0
    %296 = vmatprep.subr.mxu0 0.0
    %v297 = vand.u32 %v132, 4294901760
    %v298 = vsub.f32 %v132, %v297
    %299 = vmatpush1.msra.mxu0 %v298
    %300 = vmatprep.subr.mxu0 0.0
    %v301 = vand.u32 %v133, 4294901760
    %v302 = vsub.f32 %v133, %v301
    %303 = vmatpush1.msra.mxu0 %v302
    %304 = vmatprep.subr.mxu0 0.0
    %305 = vmatpush1.msra.mxu0 0.0
    %306 = vmatprep.subr.mxu0 0.0
    %307 = vmatpush1.msra.mxu0 0.0
    %308 = vmatprep.subr.mxu0 0.0
    %309 = vmatpush1.msra.mxu0 0.0
    %310 = vmatprep.subr.mxu0 0.0
    %311 = vmatpush1.msra.mxu0 0.0
    %312 = vmatprep.subr.mxu0 0.0
    %313 = vmatpush1.msra.mxu0 0.0
    %314 = vmatprep.subr.mxu0 0.0
    %315 = vmatpush1.msra.mxu0 0.0
    %316 = vmatprep.subr.mxu0 0.0
    %317 = vmatpush1.msra.mxu0 0.0
    %318 = vmatprep.subr.mxu0 0.0
    %319 = vmatpush1.msra.mxu0 0.0
    %320 = vmatprep.subr.mxu0 0.0
    %321 = vmatpush1.msra.mxu0 0.0
    %322 = vmatprep.subr.mxu0 0.0
    %323 = vmatpush1.msra.mxu0 0.0
    %324 = vmatprep.subr.mxu0 0.0
    %325 = vmatpush1.msra.mxu0 0.0
    %326 = vmatprep.subr.mxu0 0.0
    %327 = vmatpush1.msra.mxu0 0.0
    %328 = vmatprep.subr.mxu0 0.0
    %329 = vmatpush1.msra.mxu0 0.0
    %330 = vmatprep.subr.mxu0 0.0
    %331 = vmatpush1.msra.mxu0 0.0
    %332 = vmatprep.subr.mxu0 0.0
    %333 = vmatpush1.msra.mxu0 0.0
    %334 = vmatprep.subr.mxu0 0.0
    %335 = vmatpush1.msra.mxu0 0.0
    %336 = vmatprep.subr.mxu0 0.0
    %337 = vmatpush1.msra.mxu0 0.0
    %338 = vmatprep.subr.mxu0 0.0
    %339 = vmatpush1.msra.mxu0 0.0
    %340 = vmatprep.subr.mxu0 0.0
    %341 = vmatpush1.msra.mxu0 0.0
    %342 = vmatprep.subr.mxu0 0.0
    %343 = vmatpush1.msra.mxu0 0.0
    %344 = vmatprep.subr.mxu0 0.0
    %345 = vmatpush1.msra.mxu0 0.0
    %346 = vmatprep.subr.mxu0 0.0
    %347 = vmatpush1.msra.mxu0 0.0
    %348 = vmatprep.subr.mxu0 0.0
    %349 = vmatpush1.msra.mxu0 0.0
    %350 = vmatprep.subr.mxu0 0.0
    %351 = vmatpush1.msra.mxu0 0.0
    %352 = vmatprep.subr.mxu0 0.0
    %353 = vmatpush1.msra.mxu0 0.0
    %354 = vmatprep.subr.mxu0 0.0
    %355 = vmatpush1.msra.mxu0 0.0
    %356 = vmatprep.subr.mxu0 0.0
    %357 = vmatpush1.msra.mxu0 0.0
    %358 = vmatprep.subr.mxu0 0.0
    %359 = vmatpush1.msra.mxu0 0.0
    %360 = vmatprep.subr.mxu0 0.0
    %361 = vmatpush1.msra.mxu0 0.0
    %362 = vmatprep.subr.mxu0 0.0
    %363 = vmatpush1.msra.mxu0 0.0
    %364 = vmatprep.mubr.f32.mxu0 0.0
    %v365 = vand.u32 %v136, 4294901760
    %v366 = vsub.f32 %v136, %v365
    %367 = vmatmul.mubr.f32.gmra.mrb[0].mxu0 %v366
    %v368 = vpop.f32.mrb[0].mxu0
    %v369 = vadd.f32 %v293, %v368
    %v370 = vpop.f32.mrb[0].mxu0
    %371 = vdwg.mxu0
    %372 = vmatprep.subr.mxu0 0.0
    %v373 = vand.u32 %v132, 4294901760
    %374 = vmatpush1.msra.mxu0 %v373
    %375 = vmatprep.subr.mxu0 0.0
    %v376 = vand.u32 %v133, 4294901760
    %377 = vmatpush1.msra.mxu0 %v376
    %378 = vmatprep.subr.mxu0 0.0
    %379 = vmatpush1.msra.mxu0 0.0
    %380 = vmatprep.subr.mxu0 0.0
    %381 = vmatpush1.msra.mxu0 0.0
    %382 = vmatprep.subr.mxu0 0.0
    %383 = vmatpush1.msra.mxu0 0.0
    %384 = vmatprep.subr.mxu0 0.0
    %385 = vmatpush1.msra.mxu0 0.0
    %386 = vmatprep.subr.mxu0 0.0
    %387 = vmatpush1.msra.mxu0 0.0
    %388 = vmatprep.subr.mxu0 0.0
    %389 = vmatpush1.msra.mxu0 0.0
    %390 = vmatprep.subr.mxu0 0.0
    %391 = vmatpush1.msra.mxu0 0.0
    %392 = vmatprep.subr.mxu0 0.0
    %393 = vmatpush1.msra.mxu0 0.0
    %394 = vmatprep.subr.mxu0 0.0
    %395 = vmatpush1.msra.mxu0 0.0
    %396 = vmatprep.subr.mxu0 0.0
    %397 = vmatpush1.msra.mxu0 0.0
    %398 = vmatprep.subr.mxu0 0.0
    %399 = vmatpush1.msra.mxu0 0.0
    %400 = vmatprep.subr.mxu0 0.0
    %401 = vmatpush1.msra.mxu0 0.0
    %402 = vmatprep.subr.mxu0 0.0
    %403 = vmatpush1.msra.mxu0 0.0
    %404 = vmatprep.subr.mxu0 0.0
    %405 = vmatpush1.msra.mxu0 0.0
    %406 = vmatprep.subr.mxu0 0.0
    %407 = vmatpush1.msra.mxu0 0.0
    %408 = vmatprep.subr.mxu0 0.0
    %409 = vmatpush1.msra.mxu0 0.0
    %410 = vmatprep.subr.mxu0 0.0
    %411 = vmatpush1.msra.mxu0 0.0
    %412 = vmatprep.subr.mxu0 0.0
    %413 = vmatpush1.msra.mxu0 0.0
    %414 = vmatprep.subr.mxu0 0.0
    %415 = vmatpush1.msra.mxu0 0.0
    %416 = vmatprep.subr.mxu0 0.0
    %417 = vmatpush1.msra.mxu0 0.0
    %418 = vmatprep.subr.mxu0 0.0
    %419 = vmatpush1.msra.mxu0 0.0
    %420 = vmatprep.subr.mxu0 0.0
    %421 = vmatpush1.msra.mxu0 0.0
    %422 = vmatprep.subr.mxu0 0.0
    %423 = vmatpush1.msra.mxu0 0.0
    %424 = vmatprep.subr.mxu0 0.0
    %425 = vmatpush1.msra.mxu0 0.0
    %426 = vmatprep.subr.mxu0 0.0
    %427 = vmatpush1.msra.mxu0 0.0
    %428 = vmatprep.subr.mxu0 0.0
    %429 = vmatpush1.msra.mxu0 0.0
    %430 = vmatprep.subr.mxu0 0.0
    %431 = vmatpush1.msra.mxu0 0.0
    %432 = vmatprep.subr.mxu0 0.0
    %433 = vmatpush1.msra.mxu0 0.0
    %434 = vmatprep.subr.mxu0 0.0
    %435 = vmatpush1.msra.mxu0 0.0
    %436 = vmatprep.subr.mxu0 0.0
    %437 = vmatpush1.msra.mxu0 0.0
    %438 = vmatprep.mubr.f32.mxu0 0.0
    %v439 = vand.u32 %v136, 4294901760
    %v440 = vsub.f32 %v136, %v439
    %v441 = vand.u32 %v440, 4294901760
    %442 = vmatmul.mubr.f32.gmra.mrb[0].mxu0 %v441
    %v443 = vpop.f32.mrb[0].mxu0
    %v444 = vadd.f32 %v369, %v443
    %v445 = vpop.f32.mrb[0].mxu0
    %446 = vdwg.mxu0
    %447 = vmatprep.subr.mxu0 0.0
    %v448 = vand.u32 %v132, 4294901760
    %v449 = vsub.f32 %v132, %v448
    %v450 = vand.u32 %v449, 4294901760
    %451 = vmatpush1.msra.mxu0 %v450
    %452 = vmatprep.subr.mxu0 0.0
    %v453 = vand.u32 %v133, 4294901760
    %v454 = vsub.f32 %v133, %v453
    %v455 = vand.u32 %v454, 4294901760
    %456 = vmatpush1.msra.mxu0 %v455
    %457 = vmatprep.subr.mxu0 0.0
    %458 = vmatpush1.msra.mxu0 0.0
    %459 = vmatprep.subr.mxu0 0.0
    %460 = vmatpush1.msra.mxu0 0.0
    %461 = vmatprep.subr.mxu0 0.0
    %462 = vmatpush1.msra.mxu0 0.0
    %463 = vmatprep.subr.mxu0 0.0
    %464 = vmatpush1.msra.mxu0 0.0
    %465 = vmatprep.subr.mxu0 0.0
    %466 = vmatpush1.msra.mxu0 0.0
    %467 = vmatprep.subr.mxu0 0.0
    %468 = vmatpush1.msra.mxu0 0.0
    %469 = vmatprep.subr.mxu0 0.0
    %470 = vmatpush1.msra.mxu0 0.0
    %471 = vmatprep.subr.mxu0 0.0
    %472 = vmatpush1.msra.mxu0 0.0
    %473 = vmatprep.subr.mxu0 0.0
    %474 = vmatpush1.msra.mxu0 0.0
    %475 = vmatprep.subr.mxu0 0.0
    %476 = vmatpush1.msra.mxu0 0.0
    %477 = vmatprep.subr.mxu0 0.0
    %478 = vmatpush1.msra.mxu0 0.0
    %479 = vmatprep.subr.mxu0 0.0
    %480 = vmatpush1.msra.mxu0 0.0
    %481 = vmatprep.subr.mxu0 0.0
    %482 = vmatpush1.msra.mxu0 0.0
    %483 = vmatprep.subr.mxu0 0.0
    %484 = vmatpush1.msra.mxu0 0.0
    %485 = vmatprep.subr.mxu0 0.0
    %486 = vmatpush1.msra.mxu0 0.0
    %487 = vmatprep.subr.mxu0 0.0
    %488 = vmatpush1.msra.mxu0 0.0
    %489 = vmatprep.subr.mxu0 0.0
    %490 = vmatpush1.msra.mxu0 0.0
    %491 = vmatprep.subr.mxu0 0.0
    %492 = vmatpush1.msra.mxu0 0.0
    %493 = vmatprep.subr.mxu0 0.0
    %494 = vmatpush1.msra.mxu0 0.0
    %495 = vmatprep.subr.mxu0 0.0
    %496 = vmatpush1.msra.mxu0 0.0
    %497 = vmatprep.subr.mxu0 0.0
    %498 = vmatpush1.msra.mxu0 0.0
    %499 = vmatprep.subr.mxu0 0.0
    %500 = vmatpush1.msra.mxu0 0.0
    %501 = vmatprep.subr.mxu0 0.0
    %502 = vmatpush1.msra.mxu0 0.0
    %503 = vmatprep.subr.mxu0 0.0
    %504 = vmatpush1.msra.mxu0 0.0
    %505 = vmatprep.subr.mxu0 0.0
    %506 = vmatpush1.msra.mxu0 0.0
    %507 = vmatprep.subr.mxu0 0.0
    %508 = vmatpush1.msra.mxu0 0.0
    %509 = vmatprep.subr.mxu0 0.0
    %510 = vmatpush1.msra.mxu0 0.0
    %511 = vmatprep.subr.mxu0 0.0
    %512 = vmatpush1.msra.mxu0 0.0
    %513 = vmatprep.subr.mxu0 0.0
    %514 = vmatpush1.msra.mxu0 0.0
    %515 = vmatprep.subr.mxu0 0.0
    %516 = vmatpush1.msra.mxu0 0.0
    %517 = vmatprep.mubr.f32.mxu0 0.0
    %v518 = vand.u32 %v136, 4294901760
    %519 = vmatmul.mubr.f32.gmra.mrb[0].mxu0 %v518
    %v520 = vpop.f32.mrb[0].mxu0
    %v521 = vadd.f32 %v444, %v520
    %v522 = vpop.f32.mrb[0].mxu0
    %523 = vdwg.mxu0
    %524 = vmatprep.subr.mxu0 0.0
    %v525 = vand.u32 %v132, 4294901760
    %526 = vmatpush1.msra.mxu0 %v525
    %527 = vmatprep.subr.mxu0 0.0
    %v528 = vand.u32 %v133, 4294901760
    %529 = vmatpush1.msra.mxu0 %v528
    %530 = vmatprep.subr.mxu0 0.0
    %531 = vmatpush1.msra.mxu0 0.0
    %532 = vmatprep.subr.mxu0 0.0
    %533 = vmatpush1.msra.mxu0 0.0
    %534 = vmatprep.subr.mxu0 0.0
    %535 = vmatpush1.msra.mxu0 0.0
    %536 = vmatprep.subr.mxu0 0.0
    %537 = vmatpush1.msra.mxu0 0.0
    %538 = vmatprep.subr.mxu0 0.0
    %539 = vmatpush1.msra.mxu0 0.0
    %540 = vmatprep.subr.mxu0 0.0
    %541 = vmatpush1.msra.mxu0 0.0
    %542 = vmatprep.subr.mxu0 0.0
    %543 = vmatpush1.msra.mxu0 0.0
    %544 = vmatprep.subr.mxu0 0.0
    %545 = vmatpush1.msra.mxu0 0.0
    %546 = vmatprep.subr.mxu0 0.0
    %547 = vmatpush1.msra.mxu0 0.0
    %548 = vmatprep.subr.mxu0 0.0
    %549 = vmatpush1.msra.mxu0 0.0
    %550 = vmatprep.subr.mxu0 0.0
    %551 = vmatpush1.msra.mxu0 0.0
    %552 = vmatprep.subr.mxu0 0.0
    %553 = vmatpush1.msra.mxu0 0.0
    %554 = vmatprep.subr.mxu0 0.0
    %555 = vmatpush1.msra.mxu0 0.0
    %556 = vmatprep.subr.mxu0 0.0
    %557 = vmatpush1.msra.mxu0 0.0
    %558 = vmatprep.subr.mxu0 0.0
    %559 = vmatpush1.msra.mxu0 0.0
    %560 = vmatprep.subr.mxu0 0.0
    %561 = vmatpush1.msra.mxu0 0.0
    %562 = vmatprep.subr.mxu0 0.0
    %563 = vmatpush1.msra.mxu0 0.0
    %564 = vmatprep.subr.mxu0 0.0
    %565 = vmatpush1.msra.mxu0 0.0
    %566 = vmatprep.subr.mxu0 0.0
    %567 = vmatpush1.msra.mxu0 0.0
    %568 = vmatprep.subr.mxu0 0.0
    %569 = vmatpush1.msra.mxu0 0.0
    %570 = vmatprep.subr.mxu0 0.0
    %571 = vmatpush1.msra.mxu0 0.0
    %572 = vmatprep.subr.mxu0 0.0
    %573 = vmatpush1.msra.mxu0 0.0
    %574 = vmatprep.subr.mxu0 0.0
    %575 = vmatpush1.msra.mxu0 0.0
    %576 = vmatprep.subr.mxu0 0.0
    %577 = vmatpush1.msra.mxu0 0.0
    %578 = vmatprep.subr.mxu0 0.0
    %579 = vmatpush1.msra.mxu0 0.0
    %580 = vmatprep.subr.mxu0 0.0
    %581 = vmatpush1.msra.mxu0 0.0
    %582 = vmatprep.subr.mxu0 0.0
    %583 = vmatpush1.msra.mxu0 0.0
    %584 = vmatprep.subr.mxu0 0.0
    %585 = vmatpush1.msra.mxu0 0.0
    %586 = vmatprep.subr.mxu0 0.0
    %587 = vmatpush1.msra.mxu0 0.0
    %588 = vmatprep.subr.mxu0 0.0
    %589 = vmatpush1.msra.mxu0 0.0
    %590 = vmatprep.mubr.f32.mxu0 0.0
    %v591 = vand.u32 %v136, 4294901760
    %592 = vmatmul.mubr.f32.gmra.mrb[0].mxu0 %v591
    %v593 = vpop.f32.mrb[0].mxu0
    %v594 = vadd.f32 %v521, %v593
    %v595 = vpop.f32.mrb[0].mxu0
    %596 = vdwg.mxu0
    %v597 = vld [vmem:[#allocation3] sm:$0xff]
    %v598 = vld [vmem:[%s5] sm:$0xff]
    %v599 = vld [vmem:[%s5 + $0x8] sm:$0xff]
    %v601 = vsel %vm134, %v597, 0
    %603 = vmatprep.subr.mxu0 0.0
    %v604 = vand.u32 %v598, 4294901760
    %605 = vmatpush1.msra.mxu0 %v604
    %606 = vmatprep.subr.mxu0 0.0
    %v607 = vand.u32 %v599, 4294901760
    %608 = vmatpush1.msra.mxu0 %v607
    %609 = vmatprep.subr.mxu0 0.0
    %610 = vmatpush1.msra.mxu0 0.0
    %611 = vmatprep.subr.mxu0 0.0
    %612 = vmatpush1.msra.mxu0 0.0
    %613 = vmatprep.subr.mxu0 0.0
    %614 = vmatpush1.msra.mxu0 0.0
    %615 = vmatprep.subr.mxu0 0.0
    %616 = vmatpush1.msra.mxu0 0.0
    %617 = vmatprep.subr.mxu0 0.0
    %618 = vmatpush1.msra.mxu0 0.0
    %619 = vmatprep.subr.mxu0 0.0
    %620 = vmatpush1.msra.mxu0 0.0
    %621 = vmatprep.subr.mxu0 0.0
    %622 = vmatpush1.msra.mxu0 0.0
    %623 = vmatprep.subr.mxu0 0.0
    %624 = vmatpush1.msra.mxu0 0.0
    %625 = vmatprep.subr.mxu0 0.0
    %626 = vmatpush1.msra.mxu0 0.0
    %627 = vmatprep.subr.mxu0 0.0
    %628 = vmatpush1.msra.mxu0 0.0
    %629 = vmatprep.subr.mxu0 0.0
    %630 = vmatpush1.msra.mxu0 0.0
    %631 = vmatprep.subr.mxu0 0.0
    %632 = vmatpush1.msra.mxu0 0.0
    %633 = vmatprep.subr.mxu0 0.0
    %634 = vmatpush1.msra.mxu0 0.0
    %635 = vmatprep.subr.mxu0 0.0
    %636 = vmatpush1.msra.mxu0 0.0
    %637 = vmatprep.subr.mxu0 0.0
    %638 = vmatpush1.msra.mxu0 0.0
    %639 = vmatprep.subr.mxu0 0.0
    %640 = vmatpush1.msra.mxu0 0.0
    %641 = vmatprep.subr.mxu0 0.0
    %642 = vmatpush1.msra.mxu0 0.0
    %643 = vmatprep.subr.mxu0 0.0
    %644 = vmatpush1.msra.mxu0 0.0
    %645 = vmatprep.subr.mxu0 0.0
    %646 = vmatpush1.msra.mxu0 0.0
    %647 = vmatprep.subr.mxu0 0.0
    %648 = vmatpush1.msra.mxu0 0.0
    %649 = vmatprep.subr.mxu0 0.0
    %650 = vmatpush1.msra.mxu0 0.0
    %651 = vmatprep.subr.mxu0 0.0
    %652 = vmatpush1.msra.mxu0 0.0
    %653 = vmatprep.subr.mxu0 0.0
    %654 = vmatpush1.msra.mxu0 0.0
    %655 = vmatprep.subr.mxu0 0.0
    %656 = vmatpush1.msra.mxu0 0.0
    %657 = vmatprep.subr.mxu0 0.0
    %658 = vmatpush1.msra.mxu0 0.0
    %659 = vmatprep.subr.mxu0 0.0
    %660 = vmatpush1.msra.mxu0 0.0
    %661 = vmatprep.subr.mxu0 0.0
    %662 = vmatpush1.msra.mxu0 0.0
    %663 = vmatprep.subr.mxu0 0.0
    %664 = vmatpush1.msra.mxu0 0.0
    %665 = vmatprep.subr.mxu0 0.0
    %666 = vmatpush1.msra.mxu0 0.0
    %667 = vmatprep.subr.mxu0 0.0
    %668 = vmatpush1.msra.mxu0 0.0
    %669 = vmatprep.mubr.f32.mxu0 0.0
    %v670 = vand.u32 %v601, 4294901760
    %v671 = vsub.f32 %v601, %v670
    %v672 = vand.u32 %v671, 4294901760
    %v673 = vsub.f32 %v671, %v672
    %v674 = vand.u32 %v673, 4294901760
    %675 = vmatmul.mubr.f32.gmra.mrb[0].mxu0 %v674
    %v676 = vpop.f32.mrb[0].mxu0
    %v677 = vadd.f32 0.0, %v676
    %v678 = vpop.f32.mrb[0].mxu0
    %679 = vdwg.mxu0
    %680 = vmatprep.subr.mxu0 0.0
    %v681 = vand.u32 %v598, 4294901760
    %v682 = vsub.f32 %v598, %v681
    %v683 = vand.u32 %v682, 4294901760
    %v684 = vsub.f32 %v682, %v683
    %v685 = vand.u32 %v684, 4294901760
    %686 = vmatpush1.msra.mxu0 %v685
    %687 = vmatprep.subr.mxu0 0.0
    %v688 = vand.u32 %v599, 4294901760
    %v689 = vsub.f32 %v599, %v688
    %v690 = vand.u32 %v689, 4294901760
    %v691 = vsub.f32 %v689, %v690
    %v692 = vand.u32 %v691, 4294901760
    %693 = vmatpush1.msra.mxu0 %v692
    %694 = vmatprep.subr.mxu0 0.0
    %695 = vmatpush1.msra.mxu0 0.0
    %696 = vmatprep.subr.mxu0 0.0
    %697 = vmatpush1.msra.mxu0 0.0
    %698 = vmatprep.subr.mxu0 0.0
    %699 = vmatpush1.msra.mxu0 0.0
    %700 = vmatprep.subr.mxu0 0.0
    %701 = vmatpush1.msra.mxu0 0.0
    %702 = vmatprep.subr.mxu0 0.0
    %703 = vmatpush1.msra.mxu0 0.0
    %704 = vmatprep.subr.mxu0 0.0
    %705 = vmatpush1.msra.mxu0 0.0
    %706 = vmatprep.subr.mxu0 0.0
    %707 = vmatpush1.msra.mxu0 0.0
    %708 = vmatprep.subr.mxu0 0.0
    %709 = vmatpush1.msra.mxu0 0.0
    %710 = vmatprep.subr.mxu0 0.0
    %711 = vmatpush1.msra.mxu0 0.0
    %712 = vmatprep.subr.mxu0 0.0
    %713 = vmatpush1.msra.mxu0 0.0
    %714 = vmatprep.subr.mxu0 0.0
    %715 = vmatpush1.msra.mxu0 0.0
    %716 = vmatprep.subr.mxu0 0.0
    %717 = vmatpush1.msra.mxu0 0.0
    %718 = vmatprep.subr.mxu0 0.0
    %719 = vmatpush1.msra.mxu0 0.0
    %720 = vmatprep.subr.mxu0 0.0
    %721 = vmatpush1.msra.mxu0 0.0
    %722 = vmatprep.subr.mxu0 0.0
    %723 = vmatpush1.msra.mxu0 0.0
    %724 = vmatprep.subr.mxu0 0.0
    %725 = vmatpush1.msra.mxu0 0.0
    %726 = vmatprep.subr.mxu0 0.0
    %727 = vmatpush1.msra.mxu0 0.0
    %728 = vmatprep.subr.mxu0 0.0
    %729 = vmatpush1.msra.mxu0 0.0
    %730 = vmatprep.subr.mxu0 0.0
    %731 = vmatpush1.msra.mxu0 0.0
    %732 = vmatprep.subr.mxu0 0.0
    %733 = vmatpush1.msra.mxu0 0.0
    %734 = vmatprep.subr.mxu0 0.0
    %735 = vmatpush1.msra.mxu0 0.0
    %736 = vmatprep.subr.mxu0 0.0
    %737 = vmatpush1.msra.mxu0 0.0
    %738 = vmatprep.subr.mxu0 0.0
    %739 = vmatpush1.msra.mxu0 0.0
    %740 = vmatprep.subr.mxu0 0.0
    %741 = vmatpush1.msra.mxu0 0.0
    %742 = vmatprep.subr.mxu0 0.0
    %743 = vmatpush1.msra.mxu0 0.0
    %744 = vmatprep.subr.mxu0 0.0
    %745 = vmatpush1.msra.mxu0 0.0
    %746 = vmatprep.subr.mxu0 0.0
    %747 = vmatpush1.msra.mxu0 0.0
    %748 = vmatprep.subr.mxu0 0.0
    %749 = vmatpush1.msra.mxu0 0.0
    %750 = vmatprep.subr.mxu0 0.0
    %751 = vmatpush1.msra.mxu0 0.0
    %752 = vmatprep.subr.mxu0 0.0
    %753 = vmatpush1.msra.mxu0 0.0
    %754 = vmatprep.mubr.f32.mxu0 0.0
    %v755 = vand.u32 %v601, 4294901760
    %756 = vmatmul.mubr.f32.gmra.mrb[0].mxu0 %v755
    %v757 = vpop.f32.mrb[0].mxu0
    %v758 = vadd.f32 %v677, %v757
    %v759 = vpop.f32.mrb[0].mxu0
    %760 = vdwg.mxu0
    %761 = vmatprep.subr.mxu0 0.0
    %v762 = vand.u32 %v598, 4294901760
    %v763 = vsub.f32 %v598, %v762
    %764 = vmatpush1.msra.mxu0 %v763
    %765 = vmatprep.subr.mxu0 0.0
    %v766 = vand.u32 %v599, 4294901760
    %v767 = vsub.f32 %v599, %v766
    %768 = vmatpush1.msra.mxu0 %v767
    %769 = vmatprep.subr.mxu0 0.0
    %770 = vmatpush1.msra.mxu0 0.0
    %771 = vmatprep.subr.mxu0 0.0
    %772 = vmatpush1.msra.mxu0 0.0
    %773 = vmatprep.subr.mxu0 0.0
    %774 = vmatpush1.msra.mxu0 0.0
    %775 = vmatprep.subr.mxu0 0.0
    %776 = vmatpush1.msra.mxu0 0.0
    %777 = vmatprep.subr.mxu0 0.0
    %778 = vmatpush1.msra.mxu0 0.0
    %779 = vmatprep.subr.mxu0 0.0
    %780 = vmatpush1.msra.mxu0 0.0
    %781 = vmatprep.subr.mxu0 0.0
    %782 = vmatpush1.msra.mxu0 0.0
    %783 = vmatprep.subr.mxu0 0.0
    %784 = vmatpush1.msra.mxu0 0.0
    %785 = vmatprep.subr.mxu0 0.0
    %786 = vmatpush1.msra.mxu0 0.0
    %787 = vmatprep.subr.mxu0 0.0
    %788 = vmatpush1.msra.mxu0 0.0
    %789 = vmatprep.subr.mxu0 0.0
    %790 = vmatpush1.msra.mxu0 0.0
    %791 = vmatprep.subr.mxu0 0.0
    %792 = vmatpush1.msra.mxu0 0.0
    %793 = vmatprep.subr.mxu0 0.0
    %794 = vmatpush1.msra.mxu0 0.0
    %795 = vmatprep.subr.mxu0 0.0
    %796 = vmatpush1.msra.mxu0 0.0
    %797 = vmatprep.subr.mxu0 0.0
    %798 = vmatpush1.msra.mxu0 0.0
    %799 = vmatprep.subr.mxu0 0.0
    %800 = vmatpush1.msra.mxu0 0.0
    %801 = vmatprep.subr.mxu0 0.0
    %802 = vmatpush1.msra.mxu0 0.0
    %803 = vmatprep.subr.mxu0 0.0
    %804 = vmatpush1.msra.mxu0 0.0
    %805 = vmatprep.subr.mxu0 0.0
    %806 = vmatpush1.msra.mxu0 0.0
    %807 = vmatprep.subr.mxu0 0.0
    %808 = vmatpush1.msra.mxu0 0.0
    %809 = vmatprep.subr.mxu0 0.0
    %810 = vmatpush1.msra.mxu0 0.0
    %811 = vmatprep.subr.mxu0 0.0
    %812 = vmatpush1.msra.mxu0 0.0
    %813 = vmatprep.subr.mxu0 0.0
    %814 = vmatpush1.msra.mxu0 0.0
    %815 = vmatprep.subr.mxu0 0.0
    %816 = vmatpush1.msra.mxu0 0.0
    %817 = vmatprep.subr.mxu0 0.0
    %818 = vmatpush1.msra.mxu0 0.0
    %819 = vmatprep.subr.mxu0 0.0
    %820 = vmatpush1.msra.mxu0 0.0
    %821 = vmatprep.subr.mxu0 0.0
    %822 = vmatpush1.msra.mxu0 0.0
    %823 = vmatprep.subr.mxu0 0.0
    %824 = vmatpush1.msra.mxu0 0.0
    %825 = vmatprep.subr.mxu0 0.0
    %826 = vmatpush1.msra.mxu0 0.0
    %827 = vmatprep.subr.mxu0 0.0
    %828 = vmatpush1.msra.mxu0 0.0
    %829 = vmatprep.mubr.f32.mxu0 0.0
    %v830 = vand.u32 %v601, 4294901760
    %v831 = vsub.f32 %v601, %v830
    %832 = vmatmul.mubr.f32.gmra.mrb[0].mxu0 %v831
    %v833 = vpop.f32.mrb[0].mxu0
    %v834 = vadd.f32 %v758, %v833
    %v835 = vpop.f32.mrb[0].mxu0
    %836 = vdwg.mxu0
    %837 = vmatprep.subr.mxu0 0.0
    %v838 = vand.u32 %v598, 4294901760
    %839 = vmatpush1.msra.mxu0 %v838
    %840 = vmatprep.subr.mxu0 0.0
    %v841 = vand.u32 %v599, 4294901760
    %842 = vmatpush1.msra.mxu0 %v841
    %843 = vmatprep.subr.mxu0 0.0
    %844 = vmatpush1.msra.mxu0 0.0
    %845 = vmatprep.subr.mxu0 0.0
    %846 = vmatpush1.msra.mxu0 0.0
    %847 = vmatprep.subr.mxu0 0.0
    %848 = vmatpush1.msra.mxu0 0.0
    %849 = vmatprep.subr.mxu0 0.0
    %850 = vmatpush1.msra.mxu0 0.0
    %851 = vmatprep.subr.mxu0 0.0
    %852 = vmatpush1.msra.mxu0 0.0
    %853 = vmatprep.subr.mxu0 0.0
    %854 = vmatpush1.msra.mxu0 0.0
    %855 = vmatprep.subr.mxu0 0.0
    %856 = vmatpush1.msra.mxu0 0.0
    %857 = vmatprep.subr.mxu0 0.0
    %858 = vmatpush1.msra.mxu0 0.0
    %859 = vmatprep.subr.mxu0 0.0
    %860 = vmatpush1.msra.mxu0 0.0
    %861 = vmatprep.subr.mxu0 0.0
    %862 = vmatpush1.msra.mxu0 0.0
    %863 = vmatprep.subr.mxu0 0.0
    %864 = vmatpush1.msra.mxu0 0.0
    %865 = vmatprep.subr.mxu0 0.0
    %866 = vmatpush1.msra.mxu0 0.0
    %867 = vmatprep.subr.mxu0 0.0
    %868 = vmatpush1.msra.mxu0 0.0
    %869 = vmatprep.subr.mxu0 0.0
    %870 = vmatpush1.msra.mxu0 0.0
    %871 = vmatprep.subr.mxu0 0.0
    %872 = vmatpush1.msra.mxu0 0.0
    %873 = vmatprep.subr.mxu0 0.0
    %874 = vmatpush1.msra.mxu0 0.0
    %875 = vmatprep.subr.mxu0 0.0
    %876 = vmatpush1.msra.mxu0 0.0
    %877 = vmatprep.subr.mxu0 0.0
    %878 = vmatpush1.msra.mxu0 0.0
    %879 = vmatprep.subr.mxu0 0.0
    %880 = vmatpush1.msra.mxu0 0.0
    %881 = vmatprep.subr.mxu0 0.0
    %882 = vmatpush1.msra.mxu0 0.0
    %883 = vmatprep.subr.mxu0 0.0
    %884 = vmatpush1.msra.mxu0 0.0
    %885 = vmatprep.subr.mxu0 0.0
    %886 = vmatpush1.msra.mxu0 0.0
    %887 = vmatprep.subr.mxu0 0.0
    %888 = vmatpush1.msra.mxu0 0.0
    %889 = vmatprep.subr.mxu0 0.0
    %890 = vmatpush1.msra.mxu0 0.0
    %891 = vmatprep.subr.mxu0 0.0
    %892 = vmatpush1.msra.mxu0 0.0
    %893 = vmatprep.subr.mxu0 0.0
    %894 = vmatpush1.msra.mxu0 0.0
    %895 = vmatprep.subr.mxu0 0.0
    %896 = vmatpush1.msra.mxu0 0.0
    %897 = vmatprep.subr.mxu0 0.0
    %898 = vmatpush1.msra.mxu0 0.0
    %899 = vmatprep.subr.mxu0 0.0
    %900 = vmatpush1.msra.mxu0 0.0
    %901 = vmatprep.subr.mxu0 0.0
    %902 = vmatpush1.msra.mxu0 0.0
    %903 = vmatprep.mubr.f32.mxu0 0.0
    %v904 = vand.u32 %v601, 4294901760
    %v905 = vsub.f32 %v601, %v904
    %v906 = vand.u32 %v905, 4294901760
    %907 = vmatmul.mubr.f32.gmra.mrb[0].mxu0 %v906
    %v908 = vpop.f32.mrb[0].mxu0
    %v909 = vadd.f32 %v834, %v908
    %v910 = vpop.f32.mrb[0].mxu0
    %911 = vdwg.mxu0
    %912 = vmatprep.subr.mxu0 0.0
    %v913 = vand.u32 %v598, 4294901760
    %v914 = vsub.f32 %v598, %v913
    %v915 = vand.u32 %v914, 4294901760
    %916 = vmatpush1.msra.mxu0 %v915
    %917 = vmatprep.subr.mxu0 0.0
    %v918 = vand.u32 %v599, 4294901760
    %v919 = vsub.f32 %v599, %v918
    %v920 = vand.u32 %v919, 4294901760
    %921 = vmatpush1.msra.mxu0 %v920
    %922 = vmatprep.subr.mxu0 0.0
    %923 = vmatpush1.msra.mxu0 0.0
    %924 = vmatprep.subr.mxu0 0.0
    %925 = vmatpush1.msra.mxu0 0.0
    %926 = vmatprep.subr.mxu0 0.0
    %927 = vmatpush1.msra.mxu0 0.0
    %928 = vmatprep.subr.mxu0 0.0
    %929 = vmatpush1.msra.mxu0 0.0
    %930 = vmatprep.subr.mxu0 0.0
    %931 = vmatpush1.msra.mxu0 0.0
    %932 = vmatprep.subr.mxu0 0.0
    %933 = vmatpush1.msra.mxu0 0.0
    %934 = vmatprep.subr.mxu0 0.0
    %935 = vmatpush1.msra.mxu0 0.0
    %936 = vmatprep.subr.mxu0 0.0
    %937 = vmatpush1.msra.mxu0 0.0
    %938 = vmatprep.subr.mxu0 0.0
    %939 = vmatpush1.msra.mxu0 0.0
    %940 = vmatprep.subr.mxu0 0.0
    %941 = vmatpush1.msra.mxu0 0.0
    %942 = vmatprep.subr.mxu0 0.0
    %943 = vmatpush1.msra.mxu0 0.0
    %944 = vmatprep.subr.mxu0 0.0
    %945 = vmatpush1.msra.mxu0 0.0
    %946 = vmatprep.subr.mxu0 0.0
    %947 = vmatpush1.msra.mxu0 0.0
    %948 = vmatprep.subr.mxu0 0.0
    %949 = vmatpush1.msra.mxu0 0.0
    %950 = vmatprep.subr.mxu0 0.0
    %951 = vmatpush1.msra.mxu0 0.0
    %952 = vmatprep.subr.mxu0 0.0
    %953 = vmatpush1.msra.mxu0 0.0
    %954 = vmatprep.subr.mxu0 0.0
    %955 = vmatpush1.msra.mxu0 0.0
    %956 = vmatprep.subr.mxu0 0.0
    %957 = vmatpush1.msra.mxu0 0.0
    %958 = vmatprep.subr.mxu0 0.0
    %959 = vmatpush1.msra.mxu0 0.0
    %960 = vmatprep.subr.mxu0 0.0
    %961 = vmatpush1.msra.mxu0 0.0
    %962 = vmatprep.subr.mxu0 0.0
    %963 = vmatpush1.msra.mxu0 0.0
    %964 = vmatprep.subr.mxu0 0.0
    %965 = vmatpush1.msra.mxu0 0.0
    %966 = vmatprep.subr.mxu0 0.0
    %967 = vmatpush1.msra.mxu0 0.0
    %968 = vmatprep.subr.mxu0 0.0
    %969 = vmatpush1.msra.mxu0 0.0
    %970 = vmatprep.subr.mxu0 0.0
    %971 = vmatpush1.msra.mxu0 0.0
    %972 = vmatprep.subr.mxu0 0.0
    %973 = vmatpush1.msra.mxu0 0.0
    %974 = vmatprep.subr.mxu0 0.0
    %975 = vmatpush1.msra.mxu0 0.0
    %976 = vmatprep.subr.mxu0 0.0
    %977 = vmatpush1.msra.mxu0 0.0
    %978 = vmatprep.subr.mxu0 0.0
    %979 = vmatpush1.msra.mxu0 0.0
    %980 = vmatprep.subr.mxu0 0.0
    %981 = vmatpush1.msra.mxu0 0.0
    %982 = vmatprep.mubr.f32.mxu0 0.0
    %v983 = vand.u32 %v601, 4294901760
    %984 = vmatmul.mubr.f32.gmra.mrb[0].mxu0 %v983
    %v985 = vpop.f32.mrb[0].mxu0
    %v986 = vadd.f32 %v909, %v985
    %v987 = vpop.f32.mrb[0].mxu0
    %988 = vdwg.mxu0
    %989 = vmatprep.subr.mxu0 0.0
    %v990 = vand.u32 %v598, 4294901760
    %991 = vmatpush1.msra.mxu0 %v990
    %992 = vmatprep.subr.mxu0 0.0
    %v993 = vand.u32 %v599, 4294901760
    %994 = vmatpush1.msra.mxu0 %v993
    %995 = vmatprep.subr.mxu0 0.0
    %996 = vmatpush1.msra.mxu0 0.0
    %997 = vmatprep.subr.mxu0 0.0
    %998 = vmatpush1.msra.mxu0 0.0
    %999 = vmatprep.subr.mxu0 0.0
    %1000 = vmatpush1.msra.mxu0 0.0
    %1001 = vmatprep.subr.mxu0 0.0
    %1002 = vmatpush1.msra.mxu0 0.0
    %1003 = vmatprep.subr.mxu0 0.0
    %1004 = vmatpush1.msra.mxu0 0.0
    %1005 = vmatprep.subr.mxu0 0.0
    %1006 = vmatpush1.msra.mxu0 0.0
    %1007 = vmatprep.subr.mxu0 0.0
    %1008 = vmatpush1.msra.mxu0 0.0
    %1009 = vmatprep.subr.mxu0 0.0
    %1010 = vmatpush1.msra.mxu0 0.0
    %1011 = vmatprep.subr.mxu0 0.0
    %1012 = vmatpush1.msra.mxu0 0.0
    %1013 = vmatprep.subr.mxu0 0.0
    %1014 = vmatpush1.msra.mxu0 0.0
    %1015 = vmatprep.subr.mxu0 0.0
    %1016 = vmatpush1.msra.mxu0 0.0
    %1017 = vmatprep.subr.mxu0 0.0
    %1018 = vmatpush1.msra.mxu0 0.0
    %1019 = vmatprep.subr.mxu0 0.0
    %1020 = vmatpush1.msra.mxu0 0.0
    %1021 = vmatprep.subr.mxu0 0.0
    %1022 = vmatpush1.msra.mxu0 0.0
    %1023 = vmatprep.subr.mxu0 0.0
    %1024 = vmatpush1.msra.mxu0 0.0
    %1025 = vmatprep.subr.mxu0 0.0
    %1026 = vmatpush1.msra.mxu0 0.0
    %1027 = vmatprep.subr.mxu0 0.0
    %1028 = vmatpush1.msra.mxu0 0.0
    %1029 = vmatprep.subr.mxu0 0.0
    %1030 = vmatpush1.msra.mxu0 0.0
    %1031 = vmatprep.subr.mxu0 0.0
    %1032 = vmatpush1.msra.mxu0 0.0
    %1033 = vmatprep.subr.mxu0 0.0
    %1034 = vmatpush1.msra.mxu0 0.0
    %1035 = vmatprep.subr.mxu0 0.0
    %1036 = vmatpush1.msra.mxu0 0.0
    %1037 = vmatprep.subr.mxu0 0.0
    %1038 = vmatpush1.msra.mxu0 0.0
    %1039 = vmatprep.subr.mxu0 0.0
    %1040 = vmatpush1.msra.mxu0 0.0
    %1041 = vmatprep.subr.mxu0 0.0
    %1042 = vmatpush1.msra.mxu0 0.0
    %1043 = vmatprep.subr.mxu0 0.0
    %1044 = vmatpush1.msra.mxu0 0.0
    %1045 = vmatprep.subr.mxu0 0.0
    %1046 = vmatpush1.msra.mxu0 0.0
    %1047 = vmatprep.subr.mxu0 0.0
    %1048 = vmatpush1.msra.mxu0 0.0
    %1049 = vmatprep.subr.mxu0 0.0
    %1050 = vmatpush1.msra.mxu0 0.0
    %1051 = vmatprep.subr.mxu0 0.0
    %1052 = vmatpush1.msra.mxu0 0.0
    %1053 = vmatprep.subr.mxu0 0.0
    %1054 = vmatpush1.msra.mxu0 0.0
    %1055 = vmatprep.mubr.f32.mxu0 0.0
    %v1056 = vand.u32 %v601, 4294901760
    %1057 = vmatmul.mubr.f32.gmra.mrb[0].mxu0 %v1056
    %v1058 = vpop.f32.mrb[0].mxu0
    %v1059 = vadd.f32 %v986, %v1058
    %v1060 = vpop.f32.mrb[0].mxu0
    %1061 = vdwg.mxu0
    %v1062 = vmul.f32 %v594, %v1059
    %vm1063 = vcmask 261120
    %v1064 = vsel %vm1063, %v1062, 0.0
    %1065 = vadd.xlane.f32.xlu0 %v1064
    %v1066 = vpop.xlane.xlu0 %1065
    %v1067 = vmul.f32 %v594, %v594
    %v1068 = vsel %vm1063, %v1067, 0.0
    %1069 = vadd.xlane.f32.xlu0 %v1068
    %v1070 = vpop.xlane.xlu0 %1069
    %v1071 = vmul.f32 %v1059, %v1059
    %v1072 = vsel %vm1063, %v1071, 0.0
    %1073 = vadd.xlane.f32.xlu0 %v1072
    %v1074 = vpop.xlane.xlu0 %1073
    %v1075 = vmul.f32 %v1070, %v1074
    %v1076 = vmax.f32 %v1075, 1e-16
    %v1077 = vrsqrt.pop %v1076
    %v1078 = vmul.f32 %v1066, %v1077
    %v1079 = vlaneseq
    %v1080 = vshrl.u32 %v1079, 7
    %v1081 = vstv %s58
    %v1082 = vadd.s32 %v1080, %v1081
    %v1083 = vstv %s56
    %vm1084 = vcmp.lt.s32.totalorder %v1082, %v1083
    %v1085 = vsel %vm1084, 1.0, 0.0
    %v1086 = vstv %s57
    %vm1087 = vcmp.lt.s32.totalorder %v1082, %v1086
    %v1088 = vsel %vm1087, 1, 0
    %v1089 = vcvt.s32.f32 %v1088
    %v1090 = vsub.f32 %v1078, %v1085
    %v1091 = vmul.f32 %v1090, %v1089
    %v1092 = vmul.f32 %v1091, %v1091
    %vm1093 = vcmask 7168
    %v1094 = vsel %vm1093, %v1092, 0.0
    %1095 = vadd.xlane.f32.xlu0 %v1094
    %v1096 = vpop.xlane.xlu0 %1095
    %v1097 = vrot.slane %v1096, 4
    %v1098 = vadd.f32 %v1096, %v1097
    %v1099 = vrot.slane %v1098, 2
    %v1100 = vadd.f32 %v1098, %v1099
    %v1101 = vrot.slane %v1100, 1
    %v1102 = vadd.f32 %v1100, %v1101
    %s1103 = vtos %v1102
    %v1104 = vlaneseq
    %v1105 = vand.u32 %v1104, 127
    %vm1106 = vcmp.eq.s32.totalorder %v1080, 0
    %vm1107 = vcmp.eq.s32.totalorder %v1105, 0
    %vm1108 = vmand %vm1106, %vm1107
    %v1109 = vstv %s1103
    %v1110 = vsel %vm1108, %v1109, 0.0
    %1111 = vst [vmem:[#allocation13] sm:$0xff] %v1110
    // Predicated region
    $region22: #{tpu_custom_call.1} parent=1 // pred_check
      _
    $region23: #{tpu_custom_call.1} parent=1 // pred_check_branch
      %1113 = sbr.rel (0) target = $region25
    $region24: #{tpu_custom_call.1} parent=1 // pred_region
      %s1115 = ssub.s32 128, 128
      %1116 = vsyncadd [#allocation10], %s1115
      %s1118 = sshll.u32 [#allocation13], 4
      %s1119 = int_to_ptr.vmem [resolvable:$true] %s1118
      %1121 = dma.vmem_to_hbm [thread:$0]  %s1119, 128, %s6, [#allocation10]
    $region25: #{tpu_custom_call.1} parent=1 // pred_fallthru
      _
    // Predicated region
    $region26: #{tpu_custom_call.1} parent=1 // pred_check
      _
    $region27: #{tpu_custom_call.1} parent=1 // pred_check_branch
      %1123 = sbr.rel (0) target = $region29
    $region28: #{tpu_custom_call.1} parent=1 // pred_region
      %1124 = dma.done [#allocation10], 128
    $region29: #{tpu_custom_call.1} parent=1 // pred_fallthru
      _
    %1125 = vsyncpa [#allocation9], 1
    %1126 = vsyncpa [#allocation12], 1
    %1127 = vsyncpa [#allocation10], 1

</llo_original>
